<compile_context>
chip_gen: v6e
topology: v6e:2x2x1
jax: 0.10.0
libtpu: 0.0.40
codegen_flags: <defaults>
</compile_context>

<pallas_src>
import jax
import jax.numpy as jnp
from jax.experimental import pallas as pl
from jax.experimental.pallas import tpu as pltpu

# ----------------------------- config ---------------------------------------
LAGS = 3
LATENT = 4            # input_dim == latent_size; L+1 == LATENT so x*mask broadcasts
EMB_DIM = 8
HIDDEN = 32           # D * HIDDEN = 128 -> packed gs hidden is exactly one lane tile
BATCH = 2
LENGTH = 8
NEG_SLOPE = 0.2       # NLayerLeakyMLP uses LeakyReLU(0.2)

T_LAGS = LAGS + 1
XM_DIM = T_LAGS * 2 * LATENT      # 32
PACK = LATENT * HIDDEN            # 128 lanes for every packed block

# ---------------------- single weight-slab layout ----------------------------
_LAYOUT = (
    ("FW1", EMB_DIM), ("FW2", PACK), ("FW3", PACK),      # fc MLP
    ("NW1", XM_DIM), ("NW2", PACK), ("NW3", PACK),       # nn MLP (block-diag over lags)
    ("G1E", PACK), ("G1X", PACK),                        # gs layer-1 split weights
    ("G2", PACK), ("G3", PACK), ("G4", PACK),            # gs layers 2..4 (block-diag)
    ("BIAS", 16),                                        # all biases + t_row
)
_ROWS = dict(_LAYOUT)
_OFF = {}
_o = 0
for _k, _r in _LAYOUT:
    _OFF[_k] = _o
    _o += _r
SLAB_ROWS = _o                                           # 1208 rows x 128 lanes (~0.6 MB)

(B_FB1, B_FB2, B_FB3, B_NB1, B_NB2, B_NB3,
 B_GB1, B_GB2, B_GB3, B_GB4, B_TROW) = range(11)


def _leaky(x):
    return jnp.where(x > 0, x, NEG_SLOPE * x)


def _dleaky(x):
    return jnp.where(x > 0, jnp.float32(1.0), jnp.float32(NEG_SLOPE))


# --------------------------- fused Pallas kernel -----------------------------
def fused_kernel(emb_ref, xm_ref, w_ref, out_ref):
    n = emb_ref.shape[0]                                 # padded row count (static)
    dot = lambda a, b: jnp.dot(a, b, preferred_element_type=jnp.float32)

    def w(name):
        o = _OFF[name]
        return w_ref[o:o + _ROWS[name], :]

    def bias(i):
        o = _OFF["BIAS"] + i
        return w_ref[o:o + 1, :]

    # ---- fc MLP (zero-padded to 128 lanes; lanes >= HIDDEN stay exactly 0) ---
    h = _leaky(dot(emb_ref[...], w("FW1")) + bias(B_FB1))
    h = _leaky(dot(h, w("FW2")) + bias(B_FB2))
    emb = dot(h, w("FW3")) + bias(B_FB3)                 # (n, 128)

    # ---- nn MLP, block-diag over the L+1 lags (lanes >= (L+1)*D stay 0) ------
    h = _leaky(dot(xm_ref[...], w("NW1")) + bias(B_NB1))
    h = _leaky(dot(h, w("NW2")) + bias(B_NB2))
    xn = dot(h, w("NW3")) + bias(B_NB3)                  # (n, 128) = [yy | xx | 0...]

    # ---- gs layer 1: split dot on the shared [emb | yy | xx] input (no lane
    # concat); JVP wrt each latent's own last input = precomputed W1 row (t_row).
    a1 = dot(emb, w("G1E")) + dot(xn, w("G1X")) + bias(B_GB1)
    h1 = _leaky(a1)
    d1 = _dleaky(a1) * bias(B_TROW)

    # ---- layers 2..4: row-stack forward + tangent so each block-diag weight is
    # pushed through the MXU once (valid because the gs output layer is linear).
    p = dot(jnp.concatenate([h1, d1], axis=0), w("G2"))
    a2 = p[:n] + bias(B_GB2)
    h2 = _leaky(a2)
    d2 = _dleaky(a2) * p[n:]

    p = dot(jnp.concatenate([h2, d2], axis=0), w("G3"))
    a3 = p[:n] + bias(B_GB3)
    h3 = _leaky(a3)
    d3 = _dleaky(a3) * p[n:]

    p = dot(jnp.concatenate([h3, d3], axis=0), w("G4"))  # lanes >= LATENT are 0
    res = p[:n] + bias(B_GB4)                            # residuals in lanes [0, D)
    pdd = p[n:]                                          # d g_i / d x_i in lanes [0, D)

    # per-row sum_d log|pdd_d| (lane-masked so the zero-padded lanes contribute 0)
    lane = jax.lax.broadcasted_iota(jnp.int32, pdd.shape, 1)
    lad = jnp.log(jnp.where(lane < LATENT, jnp.abs(pdd), 1.0))
    out_ref[:, :LATENT] = res[:, :LATENT]
    out_ref[:, LATENT:] = jnp.sum(lad, axis=-1, keepdims=True)


def fused_forward_pallas(emb_p, xm_p, wslab):
    npad = emb_p.shape[0]
    return pl.pallas_call(
        fused_kernel,
        grid=(1,),
        in_specs=[
            pl.BlockSpec(emb_p.shape, lambda i: (0, 0)),
            pl.BlockSpec(xm_p.shape, lambda i: (0, 0)),
            pl.BlockSpec(wslab.shape, lambda i: (0, 0)),
        ],
        out_specs=pl.BlockSpec((npad, LATENT + 1), lambda i: (0, 0)),
        out_shape=jax.ShapeDtypeStruct((npad, LATENT + 1), jnp.float32),
        # single grid step; if N ever grows, tile the row axis and mark it
        # "parallel" (v7x megacore) instead.
        compiler_params=pltpu.CompilerParams(dimension_semantics=("arbitrary",)),
    )(emb_p, xm_p, wslab)


# ------------------ host-side weight packing (once) --------------------------
def _block_diag(blocks):
    """blocks: (K, r, c) -> (K*r, K*c) block-diagonal matrix."""
    k, r, c = blocks.shape
    out = jnp.zeros((k * r, k * c), blocks.dtype)
    for i in range(k):
        out = out.at[i * r:(i + 1) * r, i * c:(i + 1) * c].set(blocks[i])
    return out


def _block_diag_rep(w, k):
    return _block_diag(jnp.broadcast_to(w, (k,) + w.shape))


def _pad2(a, rows, cols=PACK):
    a = jnp.asarray(a, jnp.float32)
    out = jnp.zeros((rows, cols), jnp.float32)
    return out.at[:a.shape[0], :a.shape[1]].set(a)


def build_fused_slab(params):
    """Pack every weight/bias into one lane-dense (SLAB_ROWS, 128) f32 slab."""
    D, H, T = LATENT, HIDDEN, T_LAGS
    (fw1, fb1), (fw2, fb2), (fw3, fb3) = params["fc"]
    (nw1, nb1), (nw2, nb2), (nw3, nb3) = params["nn"]
    w1s, b1s, w2s, b2s, w3s, b3s, w4s, b4s = params["gs"]     # (D, in, out), (D, 1, out)

    # gs layer-1 split: dense rows for emb / yy (shared across latents), plus a
    # block-diagonal row per latent for its own last input x_i.
    g1e = jnp.transpose(w1s[:, :H, :], (1, 0, 2)).reshape(H, D * H)                 # (32, 128)
    g1y = jnp.transpose(w1s[:, H:H + LAGS * D, :], (1, 0, 2)).reshape(LAGS * D, D * H)
    g1x = jnp.concatenate([g1y, _block_diag(w1s[:, -1:, :])], axis=0)               # (16, 128)

    # tangent through layer 1 for the one-hot on each latent's last input:
    # e_last @ W1_i is just the last row of W1_i (output layer is linear).
    trow = w1s[:, -1, :].reshape(1, D * H)
    gb1 = b1s[:, 0, :].reshape(1, D * H)
    gb2 = b2s[:, 0, :].reshape(1, D * H)
    gb3 = b3s[:, 0, :].reshape(1, D * H)
    gb4 = b4s[:, 0, 0].reshape(1, D)

    bias_rows = [
        _pad2(fb1, 1), _pad2(fb2, 1), _pad2(fb3, 1),
        _pad2(jnp.tile(nb1, (1, T)), 1), _pad2(jnp.tile(nb2, (1, T)), 1),
        _pad2(jnp.tile(nb3, (1, T)), 1),
        _pad2(gb1, 1), _pad2(gb2, 1), _pad2(gb3, 1), _pad2(gb4, 1), _pad2(trow, 1),
    ]
    bias_block = jnp.concatenate(
        bias_rows + [jnp.zeros((_ROWS["BIAS"] - len(bias_rows), PACK), jnp.float32)],
        axis=0)

    blocks = {
        "FW1": _pad2(fw1, _ROWS["FW1"]),
        "FW2": _pad2(fw2, _ROWS["FW2"]),
        "FW3": _pad2(fw3, _ROWS["FW3"]),
        "NW1": _pad2(_block_diag_rep(nw1, T), _ROWS["NW1"]),
        "NW2": _pad2(_block_diag_rep(nw2, T), _ROWS["NW2"]),
        "NW3": _pad2(_block_diag_rep(nw3, T), _ROWS["NW3"]),
        "G1E": _pad2(g1e, _ROWS["G1E"]),
        "G1X": _pad2(g1x, _ROWS["G1X"]),
        "G2": _pad2(_block_diag(w2s), _ROWS["G2"]),
        "G3": _pad2(_block_diag(w3s), _ROWS["G3"]),
        "G4": _pad2(_block_diag(w4s), _ROWS["G4"]),
        "BIAS": bias_block,
    }
    slab = jnp.concatenate([blocks[k] for k, _ in _LAYOUT], axis=0)
    assert slab.shape == (SLAB_ROWS, PACK)
    return slab


# --------------------------- parameter init ----------------------------------
def _init_linear(key, fan_in, fan_out):
    kw, kb = jax.random.split(key)
    bound = 1.0 / jnp.sqrt(jnp.float32(fan_in))
    w = jax.random.uniform(kw, (fan_in, fan_out), jnp.float32, -bound, bound)
    b = jax.random.uniform(kb, (fan_out,), jnp.float32, -bound, bound)
    return w, b


def init_mlp2(key, in_dim, hidden, out_dim):
    k1, k2, k3 = jax.random.split(key, 3)
    w1, b1 = _init_linear(k1, in_dim, hidden)
    w2, b2 = _init_linear(k2, hidden, hidden)
    w3, b3 = _init_linear(k3, hidden, out_dim)
    return ((w1, b1.reshape(1, -1)), (w2, b2.reshape(1, -1)), (w3, b3.reshape(1, -1)))


def init_gs(key, d, in_dim, hidden):
    stacks = [[] for _ in range(8)]
    for i in range(d):
        ks = jax.random.split(jax.random.fold_in(key, i), 4)
        w1, b1 = _init_linear(ks[0], in_dim, hidden)
        w2, b2 = _init_linear(ks[1], hidden, hidden)
        w3, b3 = _init_linear(ks[2], hidden, hidden)
        w4, b4 = _init_linear(ks[3], hidden, 1)
        for s, a in zip(stacks, (w1, b1.reshape(1, -1), w2, b2.reshape(1, -1),
                                 w3, b3.reshape(1, -1), w4, b4.reshape(1, -1))):
            s.append(a)
    return tuple(jnp.stack(s, axis=0) for s in stacks)


# ------------------------- pure-JAX reference (checks) ------------------------
def mlp2_ref(x, params):
    (w1, b1), (w2, b2), (w3, b3) = params
    h = _leaky(x @ w1 + b1)
    h = _leaky(h @ w2 + b2)
    return h @ w3 + b3


def gs_apply_ref(v, w1, b1, w2, b2, w3, b3, w4, b4):
    h = _leaky(v @ w1 + b1)
    h = _leaky(h @ w2 + b2)
    h = _leaky(h @ w3 + b3)
    return h @ w4 + b4


# ----------------------------- forward pass ----------------------------------
def forward(params, x, embeddings, mask_key, use_pallas=True, wslab=None):
    B, length, D = x.shape
    L = LAGS
    Tm = length - L
    N = B * Tm

    # x.unfold(1, L+1, 1).swapaxes(2, 3)  -> (B, Tm, L+1, D)
    idx = jnp.arange(Tm)[:, None] + jnp.arange(L + 1)[None, :]
    xu = x[:, idx, :]

    # sample_mask(zeros(D, D), tau=0.3): sigmoid(logistic_noise/0.3) * (1 - eye)
    U = jax.random.uniform(mask_key, (D, D), jnp.float32, minval=1e-6, maxval=1.0 - 1e-6)
    noise = jnp.log(U) - jnp.log(1.0 - U)
    ins_mask = jax.nn.sigmoid(noise / 0.3) * (1.0 - jnp.eye(D, dtype=jnp.float32))
    # TODO(synk): source forward uses an undefined name `mask`; interpreted as `ins_mask`.

    # cat([x, x*mask], -1), all L+1 lags packed per row: (N, (L+1)*2D)
    xm_packed = jnp.concatenate([xu, xu * ins_mask], axis=-1).reshape(N, T_LAGS * 2 * D)

    if use_pallas:
        if wslab is None:
            wslab = build_fused_slab(params)
        npad = ((N + 7) // 8) * 8          # sublane-align rows (tile-aligned fwd/JVP split)
        emb_p = jnp.zeros((npad, EMB_DIM), jnp.float32).at[:N].set(embeddings)
        xm_p = jnp.zeros((npad, T_LAGS * 2 * D), jnp.float32).at[:N].set(xm_packed)
        out = fused_forward_pallas(emb_p, xm_p, wslab)       # (npad, D+1)
        res = out[:N, :D]
        row_lad = out[:N, D]                                 # per-row sum_d log|dg_d/dx_d|
    else:
        emb = mlp2_ref(embeddings, params["fc"])
        xm = xm_packed.reshape(N * T_LAGS, 2 * D)
        xn = mlp2_ref(xm, params["nn"]).reshape(N, T_LAGS, D)
        xx = xn[:, -1, :]
        yy = xn[:, :-1, :].reshape(N, L * D)
        w1s, b1s, w2s, b2s, w3s, b3s, w4s, b4s = params["gs"]
        rs, ds = [], []
        for i in range(D):
            ins_i = jnp.concatenate([emb, yy, xx[:, i:i + 1]], axis=-1)
            f = lambda v, i=i: gs_apply_ref(v, w1s[i], b1s[i, 0], w2s[i], b2s[i, 0],
                                            w3s[i], b3s[i, 0], w4s[i], b4s[i, 0])
            tang = jnp.zeros_like(ins_i).at[:, -1].set(1.0)
            r, dr = jax.jvp(f, (ins_i,), (tang,))
            rs.append(r)
            ds.append(dr)
        res = jnp.concatenate(rs, axis=-1)                             # (N, D)
        row_lad = jnp.log(jnp.abs(jnp.concatenate(ds, axis=-1))).sum(axis=-1)

    residuals = res.reshape(B, Tm, D)
    sum_lad = row_lad.reshape(B, Tm).sum(axis=1)
    return residuals, sum_lad


# --------------------------------- main --------------------------------------
if __name__ == "__main__":
    key = jax.random.PRNGKey(0)
    k_x, k_emb, k_mask, k_fc, k_nn, k_gs = jax.random.split(key, 6)

    Tm = LENGTH - LAGS
    x = jax.random.normal(k_x, (BATCH, LENGTH, LATENT), jnp.float32)
    embeddings = jax.random.normal(k_emb, (BATCH * Tm, EMB_DIM), jnp.float32)

    gs_in_dim = HIDDEN + LAGS * LATENT + 1
    params = {
        "fc": init_mlp2(k_fc, EMB_DIM, HIDDEN, HIDDEN),        # num_layers=2 MLP
        "nn": init_mlp2(k_nn, 2 * LATENT, HIDDEN, LATENT),     # num_layers=2 MLP
        "gs": init_gs(k_gs, LATENT, gs_in_dim, HIDDEN),        # num_layers=3 MLPs
    }
    wslab = build_fused_slab(params)                           # weight packing, once

    residuals, logdet = forward(params, x, embeddings, k_mask, use_pallas=True, wslab=wslab)
    residuals = jax.block_until_ready(residuals)
    logdet = jax.block_until_ready(logdet)

    # silent correctness check against a pure-JAX reference (same mask key)
    r_ref, ld_ref = forward(params, x, embeddings, k_mask, use_pallas=False)
    assert residuals.shape == (BATCH, Tm, LATENT) and logdet.shape == (BATCH,)
    assert jnp.allclose(residuals, r_ref, rtol=1e-4, atol=1e-4)
    assert jnp.allclose(logdet, ld_ref, rtol=1e-4, atol=1e-4)

    print("KERNEL_OK")
</pallas_src>

<mosaic_0001>
module attributes {stable_mosaic.version = 11 : i64} {
  func.func @fused_kernel(%arg0: i32, %arg1: memref<16x8xf32, #tpu.memory_space<vmem>>, %arg2: memref<16x32xf32, #tpu.memory_space<vmem>>, %arg3: memref<1208x128xf32, #tpu.memory_space<vmem>>, %arg4: memref<16x5xf32, #tpu.memory_space<vmem>>) attributes {dimension_semantics = [#tpu.dimension_semantics<arbitrary>], iteration_bounds = array<i64: 1>, scalar_prefetch = 0 : i64, scratch_operands = 0 : i64, tpu.core_type = #tpu.core_type<tc>, window_params = [{pipeline_mode = #tpu.pipeline_mode<synchronous>, transform_indices = @transform_0, window_bounds = array<i64: 16, 8>}, {pipeline_mode = #tpu.pipeline_mode<synchronous>, transform_indices = @transform_1, window_bounds = array<i64: 16, 32>}, {pipeline_mode = #tpu.pipeline_mode<synchronous>, transform_indices = @transform_2, window_bounds = array<i64: 1208, 128>}, {pipeline_mode = #tpu.pipeline_mode<synchronous>, transform_indices = @transform_3, window_bounds = array<i64: 16, 5>}]} {
    %c0 = arith.constant 0 : index
    %c0_0 = arith.constant 0 : index
    %0 = vector.load %arg1[%c0, %c0_0] : memref<16x8xf32, #tpu.memory_space<vmem>>, vector<16x8xf32>
    %c0_1 = arith.constant 0 : index
    %c0_2 = arith.constant 0 : index
    %1 = vector.load %arg3[%c0_1, %c0_2] : memref<1208x128xf32, #tpu.memory_space<vmem>>, vector<8x128xf32>
    %cst = arith.constant dense<0.000000e+00> : vector<16x128xf32>
    %2 = tpu.matmul %0, %1, %cst {dimension_numbers = #tpu.dot_dimension_numbers<[1], [0], [0], [1], [0, 0, 1, 1], [], []>} : vector<16x8xf32>, vector<8x128xf32>, vector<16x128xf32> -> vector<16x128xf32>
    %c1192 = arith.constant 1192 : index
    %c0_3 = arith.constant 0 : index
    %3 = vector.load %arg3[%c1192, %c0_3] : memref<1208x128xf32, #tpu.memory_space<vmem>>, vector<1x128xf32>
    %4 = vector.broadcast %3 : vector<1x128xf32> to vector<16x128xf32>
    %5 = arith.addf %2, %4 : vector<16x128xf32>
    %cst_4 = arith.constant 0.000000e+00 : f32
    %6 = vector.broadcast %cst_4 : f32 to vector<16x128xf32>
    %7 = arith.cmpf ogt, %5, %6 : vector<16x128xf32>
    %cst_5 = arith.constant 2.000000e-01 : f32
    %8 = vector.broadcast %cst_5 : f32 to vector<16x128xf32>
    %9 = arith.mulf %8, %5 : vector<16x128xf32>
    %10 = arith.select %7, %5, %9 : vector<16x128xi1>, vector<16x128xf32>
    %c8 = arith.constant 8 : index
    %c0_6 = arith.constant 0 : index
    %11 = vector.load %arg3[%c8, %c0_6] : memref<1208x128xf32, #tpu.memory_space<vmem>>, vector<128x128xf32>
    %cst_7 = arith.constant dense<0.000000e+00> : vector<16x128xf32>
    %12 = tpu.matmul %10, %11, %cst_7 {dimension_numbers = #tpu.dot_dimension_numbers<[1], [0], [0], [1], [0, 0, 1, 1], [], []>} : vector<16x128xf32>, vector<128x128xf32>, vector<16x128xf32> -> vector<16x128xf32>
    %c1193 = arith.constant 1193 : index
    %c0_8 = arith.constant 0 : index
    %13 = vector.load %arg3[%c1193, %c0_8] : memref<1208x128xf32, #tpu.memory_space<vmem>>, vector<1x128xf32>
    %14 = vector.broadcast %13 : vector<1x128xf32> to vector<16x128xf32>
    %15 = arith.addf %12, %14 : vector<16x128xf32>
    %cst_9 = arith.constant 0.000000e+00 : f32
    %16 = vector.broadcast %cst_9 : f32 to vector<16x128xf32>
    %17 = arith.cmpf ogt, %15, %16 : vector<16x128xf32>
    %cst_10 = arith.constant 2.000000e-01 : f32
    %18 = vector.broadcast %cst_10 : f32 to vector<16x128xf32>
    %19 = arith.mulf %18, %15 : vector<16x128xf32>
    %20 = arith.select %17, %15, %19 : vector<16x128xi1>, vector<16x128xf32>
    %c136 = arith.constant 136 : index
    %c0_11 = arith.constant 0 : index
    %21 = vector.load %arg3[%c136, %c0_11] : memref<1208x128xf32, #tpu.memory_space<vmem>>, vector<128x128xf32>
    %cst_12 = arith.constant dense<0.000000e+00> : vector<16x128xf32>
    %22 = tpu.matmul %20, %21, %cst_12 {dimension_numbers = #tpu.dot_dimension_numbers<[1], [0], [0], [1], [0, 0, 1, 1], [], []>} : vector<16x128xf32>, vector<128x128xf32>, vector<16x128xf32> -> vector<16x128xf32>
    %c1194 = arith.constant 1194 : index
    %c0_13 = arith.constant 0 : index
    %23 = vector.load %arg3[%c1194, %c0_13] : memref<1208x128xf32, #tpu.memory_space<vmem>>, vector<1x128xf32>
    %24 = vector.broadcast %23 : vector<1x128xf32> to vector<16x128xf32>
    %25 = arith.addf %22, %24 : vector<16x128xf32>
    %c0_14 = arith.constant 0 : index
    %c0_15 = arith.constant 0 : index
    %26 = vector.load %arg2[%c0_14, %c0_15] : memref<16x32xf32, #tpu.memory_space<vmem>>, vector<16x32xf32>
    %c264 = arith.constant 264 : index
    %c0_16 = arith.constant 0 : index
    %27 = vector.load %arg3[%c264, %c0_16] : memref<1208x128xf32, #tpu.memory_space<vmem>>, vector<32x128xf32>
    %cst_17 = arith.constant dense<0.000000e+00> : vector<16x128xf32>
    %28 = tpu.matmul %26, %27, %cst_17 {dimension_numbers = #tpu.dot_dimension_numbers<[1], [0], [0], [1], [0, 0, 1, 1], [], []>} : vector<16x32xf32>, vector<32x128xf32>, vector<16x128xf32> -> vector<16x128xf32>
    %c1195 = arith.constant 1195 : index
    %c0_18 = arith.constant 0 : index
    %29 = vector.load %arg3[%c1195, %c0_18] : memref<1208x128xf32, #tpu.memory_space<vmem>>, vector<1x128xf32>
    %30 = vector.broadcast %29 : vector<1x128xf32> to vector<16x128xf32>
    %31 = arith.addf %28, %30 : vector<16x128xf32>
    %cst_19 = arith.constant 0.000000e+00 : f32
    %32 = vector.broadcast %cst_19 : f32 to vector<16x128xf32>
    %33 = arith.cmpf ogt, %31, %32 : vector<16x128xf32>
    %cst_20 = arith.constant 2.000000e-01 : f32
    %34 = vector.broadcast %cst_20 : f32 to vector<16x128xf32>
    %35 = arith.mulf %34, %31 : vector<16x128xf32>
    %36 = arith.select %33, %31, %35 : vector<16x128xi1>, vector<16x128xf32>
    %c296 = arith.constant 296 : index
    %c0_21 = arith.constant 0 : index
    %37 = vector.load %arg3[%c296, %c0_21] : memref<1208x128xf32, #tpu.memory_space<vmem>>, vector<128x128xf32>
    %cst_22 = arith.constant dense<0.000000e+00> : vector<16x128xf32>
    %38 = tpu.matmul %36, %37, %cst_22 {dimension_numbers = #tpu.dot_dimension_numbers<[1], [0], [0], [1], [0, 0, 1, 1], [], []>} : vector<16x128xf32>, vector<128x128xf32>, vector<16x128xf32> -> vector<16x128xf32>
    %c1196 = arith.constant 1196 : index
    %c0_23 = arith.constant 0 : index
    %39 = vector.load %arg3[%c1196, %c0_23] : memref<1208x128xf32, #tpu.memory_space<vmem>>, vector<1x128xf32>
    %40 = vector.broadcast %39 : vector<1x128xf32> to vector<16x128xf32>
    %41 = arith.addf %38, %40 : vector<16x128xf32>
    %cst_24 = arith.constant 0.000000e+00 : f32
    %42 = vector.broadcast %cst_24 : f32 to vector<16x128xf32>
    %43 = arith.cmpf ogt, %41, %42 : vector<16x128xf32>
    %cst_25 = arith.constant 2.000000e-01 : f32
    %44 = vector.broadcast %cst_25 : f32 to vector<16x128xf32>
    %45 = arith.mulf %44, %41 : vector<16x128xf32>
    %46 = arith.select %43, %41, %45 : vector<16x128xi1>, vector<16x128xf32>
    %c424 = arith.constant 424 : index
    %c0_26 = arith.constant 0 : index
    %47 = vector.load %arg3[%c424, %c0_26] : memref<1208x128xf32, #tpu.memory_space<vmem>>, vector<128x128xf32>
    %cst_27 = arith.constant dense<0.000000e+00> : vector<16x128xf32>
    %48 = tpu.matmul %46, %47, %cst_27 {dimension_numbers = #tpu.dot_dimension_numbers<[1], [0], [0], [1], [0, 0, 1, 1], [], []>} : vector<16x128xf32>, vector<128x128xf32>, vector<16x128xf32> -> vector<16x128xf32>
    %c1197 = arith.constant 1197 : index
    %c0_28 = arith.constant 0 : index
    %49 = vector.load %arg3[%c1197, %c0_28] : memref<1208x128xf32, #tpu.memory_space<vmem>>, vector<1x128xf32>
    %50 = vector.broadcast %49 : vector<1x128xf32> to vector<16x128xf32>
    %51 = arith.addf %48, %50 : vector<16x128xf32>
    %c552 = arith.constant 552 : index
    %c0_29 = arith.constant 0 : index
    %52 = vector.load %arg3[%c552, %c0_29] : memref<1208x128xf32, #tpu.memory_space<vmem>>, vector<128x128xf32>
    %cst_30 = arith.constant dense<0.000000e+00> : vector<16x128xf32>
    %53 = tpu.matmul %25, %52, %cst_30 {dimension_numbers = #tpu.dot_dimension_numbers<[1], [0], [0], [1], [0, 0, 1, 1], [], []>} : vector<16x128xf32>, vector<128x128xf32>, vector<16x128xf32> -> vector<16x128xf32>
    %c680 = arith.constant 680 : index
    %c0_31 = arith.constant 0 : index
    %54 = vector.load %arg3[%c680, %c0_31] : memref<1208x128xf32, #tpu.memory_space<vmem>>, vector<128x128xf32>
    %cst_32 = arith.constant dense<0.000000e+00> : vector<16x128xf32>
    %55 = tpu.matmul %51, %54, %cst_32 {dimension_numbers = #tpu.dot_dimension_numbers<[1], [0], [0], [1], [0, 0, 1, 1], [], []>} : vector<16x128xf32>, vector<128x128xf32>, vector<16x128xf32> -> vector<16x128xf32>
    %56 = arith.addf %53, %55 : vector<16x128xf32>
    %c1198 = arith.constant 1198 : index
    %c0_33 = arith.constant 0 : index
    %57 = vector.load %arg3[%c1198, %c0_33] : memref<1208x128xf32, #tpu.memory_space<vmem>>, vector<1x128xf32>
    %58 = vector.broadcast %57 : vector<1x128xf32> to vector<16x128xf32>
    %59 = arith.addf %56, %58 : vector<16x128xf32>
    %cst_34 = arith.constant 0.000000e+00 : f32
    %60 = vector.broadcast %cst_34 : f32 to vector<16x128xf32>
    %61 = arith.cmpf ogt, %59, %60 : vector<16x128xf32>
    %cst_35 = arith.constant 2.000000e-01 : f32
    %62 = vector.broadcast %cst_35 : f32 to vector<16x128xf32>
    %63 = arith.mulf %62, %59 : vector<16x128xf32>
    %64 = arith.select %61, %59, %63 : vector<16x128xi1>, vector<16x128xf32>
    %cst_36 = arith.constant 0.000000e+00 : f32
    %65 = vector.broadcast %cst_36 : f32 to vector<16x128xf32>
    %66 = arith.cmpf ogt, %59, %65 : vector<16x128xf32>
    %cst_37 = arith.constant 1.000000e+00 : f32
    %cst_38 = arith.constant 2.000000e-01 : f32
    %67 = vector.broadcast %cst_37 : f32 to vector<16x128xf32>
    %68 = vector.broadcast %cst_38 : f32 to vector<16x128xf32>
    %69 = arith.select %66, %67, %68 : vector<16x128xi1>, vector<16x128xf32>
    %c1202 = arith.constant 1202 : index
    %c0_39 = arith.constant 0 : index
    %70 = vector.load %arg3[%c1202, %c0_39] : memref<1208x128xf32, #tpu.memory_space<vmem>>, vector<1x128xf32>
    %71 = vector.broadcast %70 : vector<1x128xf32> to vector<16x128xf32>
    %72 = arith.mulf %69, %71 : vector<16x128xf32>
    %73 = tpu.concatenate %64, %72 in 0 : vector<16x128xf32>, vector<16x128xf32> -> vector<32x128xf32>
    %c808 = arith.constant 808 : index
    %c0_40 = arith.constant 0 : index
    %74 = vector.load %arg3[%c808, %c0_40] : memref<1208x128xf32, #tpu.memory_space<vmem>>, vector<128x128xf32>
    %cst_41 = arith.constant dense<0.000000e+00> : vector<32x128xf32>
    %75 = tpu.matmul %73, %74, %cst_41 {dimension_numbers = #tpu.dot_dimension_numbers<[1], [0], [0], [1], [0, 0, 1, 1], [], []>} : vector<32x128xf32>, vector<128x128xf32>, vector<32x128xf32> -> vector<32x128xf32>
    %76 = vector.extract_strided_slice %75 {offsets = [0, 0], sizes = [16, 128], strides = [1, 1]} : vector<32x128xf32> to vector<16x128xf32>
    %c1199 = arith.constant 1199 : index
    %c0_42 = arith.constant 0 : index
    %77 = vector.load %arg3[%c1199, %c0_42] : memref<1208x128xf32, #tpu.memory_space<vmem>>, vector<1x128xf32>
    %78 = vector.broadcast %77 : vector<1x128xf32> to vector<16x128xf32>
    %79 = arith.addf %76, %78 : vector<16x128xf32>
    %cst_43 = arith.constant 0.000000e+00 : f32
    %80 = vector.broadcast %cst_43 : f32 to vector<16x128xf32>
    %81 = arith.cmpf ogt, %79, %80 : vector<16x128xf32>
    %cst_44 = arith.constant 2.000000e-01 : f32
    %82 = vector.broadcast %cst_44 : f32 to vector<16x128xf32>
    %83 = arith.mulf %82, %79 : vector<16x128xf32>
    %84 = arith.select %81, %79, %83 : vector<16x128xi1>, vector<16x128xf32>
    %cst_45 = arith.constant 0.000000e+00 : f32
    %85 = vector.broadcast %cst_45 : f32 to vector<16x128xf32>
    %86 = arith.cmpf ogt, %79, %85 : vector<16x128xf32>
    %cst_46 = arith.constant 1.000000e+00 : f32
    %cst_47 = arith.constant 2.000000e-01 : f32
    %87 = vector.broadcast %cst_46 : f32 to vector<16x128xf32>
    %88 = vector.broadcast %cst_47 : f32 to vector<16x128xf32>
    %89 = arith.select %86, %87, %88 : vector<16x128xi1>, vector<16x128xf32>
    %90 = vector.extract_strided_slice %75 {offsets = [16, 0], sizes = [16, 128], strides = [1, 1]} : vector<32x128xf32> to vector<16x128xf32>
    %91 = arith.mulf %89, %90 : vector<16x128xf32>
    %92 = tpu.concatenate %84, %91 in 0 : vector<16x128xf32>, vector<16x128xf32> -> vector<32x128xf32>
    %c936 = arith.constant 936 : index
    %c0_48 = arith.constant 0 : index
    %93 = vector.load %arg3[%c936, %c0_48] : memref<1208x128xf32, #tpu.memory_space<vmem>>, vector<128x128xf32>
    %cst_49 = arith.constant dense<0.000000e+00> : vector<32x128xf32>
    %94 = tpu.matmul %92, %93, %cst_49 {dimension_numbers = #tpu.dot_dimension_numbers<[1], [0], [0], [1], [0, 0, 1, 1], [], []>} : vector<32x128xf32>, vector<128x128xf32>, vector<32x128xf32> -> vector<32x128xf32>
    %95 = vector.extract_strided_slice %94 {offsets = [0, 0], sizes = [16, 128], strides = [1, 1]} : vector<32x128xf32> to vector<16x128xf32>
    %c1200 = arith.constant 1200 : index
    %c0_50 = arith.constant 0 : index
    %96 = vector.load %arg3[%c1200, %c0_50] : memref<1208x128xf32, #tpu.memory_space<vmem>>, vector<1x128xf32>
    %97 = vector.broadcast %96 : vector<1x128xf32> to vector<16x128xf32>
    %98 = arith.addf %95, %97 : vector<16x128xf32>
    %cst_51 = arith.constant 0.000000e+00 : f32
    %99 = vector.broadcast %cst_51 : f32 to vector<16x128xf32>
    %100 = arith.cmpf ogt, %98, %99 : vector<16x128xf32>
    %cst_52 = arith.constant 2.000000e-01 : f32
    %101 = vector.broadcast %cst_52 : f32 to vector<16x128xf32>
    %102 = arith.mulf %101, %98 : vector<16x128xf32>
    %103 = arith.select %100, %98, %102 : vector<16x128xi1>, vector<16x128xf32>
    %cst_53 = arith.constant 0.000000e+00 : f32
    %104 = vector.broadcast %cst_53 : f32 to vector<16x128xf32>
    %105 = arith.cmpf ogt, %98, %104 : vector<16x128xf32>
    %cst_54 = arith.constant 1.000000e+00 : f32
    %cst_55 = arith.constant 2.000000e-01 : f32
    %106 = vector.broadcast %cst_54 : f32 to vector<16x128xf32>
    %107 = vector.broadcast %cst_55 : f32 to vector<16x128xf32>
    %108 = arith.select %105, %106, %107 : vector<16x128xi1>, vector<16x128xf32>
    %109 = vector.extract_strided_slice %94 {offsets = [16, 0], sizes = [16, 128], strides = [1, 1]} : vector<32x128xf32> to vector<16x128xf32>
    %110 = arith.mulf %108, %109 : vector<16x128xf32>
    %111 = tpu.concatenate %103, %110 in 0 : vector<16x128xf32>, vector<16x128xf32> -> vector<32x128xf32>
    %c1064 = arith.constant 1064 : index
    %c0_56 = arith.constant 0 : index
    %112 = vector.load %arg3[%c1064, %c0_56] : memref<1208x128xf32, #tpu.memory_space<vmem>>, vector<128x128xf32>
    %cst_57 = arith.constant dense<0.000000e+00> : vector<32x128xf32>
    %113 = tpu.matmul %111, %112, %cst_57 {dimension_numbers = #tpu.dot_dimension_numbers<[1], [0], [0], [1], [0, 0, 1, 1], [], []>} : vector<32x128xf32>, vector<128x128xf32>, vector<32x128xf32> -> vector<32x128xf32>
    %114 = vector.extract_strided_slice %113 {offsets = [0, 0], sizes = [16, 128], strides = [1, 1]} : vector<32x128xf32> to vector<16x128xf32>
    %c1201 = arith.constant 1201 : index
    %c0_58 = arith.constant 0 : index
    %115 = vector.load %arg3[%c1201, %c0_58] : memref<1208x128xf32, #tpu.memory_space<vmem>>, vector<1x128xf32>
    %116 = vector.broadcast %115 : vector<1x128xf32> to vector<16x128xf32>
    %117 = arith.addf %114, %116 : vector<16x128xf32>
    %118 = vector.extract_strided_slice %113 {offsets = [16, 0], sizes = [16, 128], strides = [1, 1]} : vector<32x128xf32> to vector<16x128xf32>
    %119 = tpu.iota {dimensions = array<i32: 1>} : vector<16x128xi32>
    %c4_i32 = arith.constant 4 : i32
    %120 = vector.broadcast %c4_i32 : i32 to vector<16x128xi32>
    %121 = arith.cmpi slt, %119, %120 : vector<16x128xi32>
    %122 = math.absf %118 : vector<16x128xf32>
    %cst_59 = arith.constant 1.000000e+00 : f32
    %123 = vector.broadcast %cst_59 : f32 to vector<16x128xf32>
    %124 = arith.select %121, %122, %123 : vector<16x128xi1>, vector<16x128xf32>
    %125 = math.log %124 : vector<16x128xf32>
    %126 = vector.extract_strided_slice %117 {offsets = [0, 0], sizes = [16, 4], strides = [1, 1]} : vector<16x128xf32> to vector<16x4xf32>
    %c0_60 = arith.constant 0 : index
    %c0_61 = arith.constant 0 : index
    %127 = vector.load %arg4[%c0_60, %c0_61] : memref<16x5xf32, #tpu.memory_space<vmem>>, vector<16x4xf32>
    tpu.vector_store %arg4[%c0_60, %c0_61], %126 {strides = array<i32>} : memref<16x5xf32, #tpu.memory_space<vmem>>, vector<16x4xf32>,
    %cst_62 = arith.constant dense<0.000000e+00> : vector<16xf32>
    %128 = vector.multi_reduction <add>, %125, %cst_62 [1] : vector<16x128xf32> to vector<16xf32>
    %129 = vector.shape_cast %128 : vector<16xf32> to vector<16x1xf32>
    %c0_63 = arith.constant 0 : index
    %c4 = arith.constant 4 : index
    %130 = vector.load %arg4[%c0_63, %c4] : memref<16x5xf32, #tpu.memory_space<vmem>>, vector<16x1xf32>
    tpu.vector_store %arg4[%c0_63, %c4], %129 {strides = array<i32>} : memref<16x5xf32, #tpu.memory_space<vmem>>, vector<16x1xf32>,
    return
  }
  func.func @transform_0(%arg0: i32) -> (i32, i32) {
    %c0_i32 = arith.constant 0 : i32
    %c0_i32_0 = arith.constant 0 : i32
    %c0_i32_1 = arith.constant 0 : i32
    return %c0_i32, %c0_i32_0 : i32, i32
  }
  func.func @transform_1(%arg0: i32) -> (i32, i32) {
    %c0_i32 = arith.constant 0 : i32
    %c0_i32_0 = arith.constant 0 : i32
    %c0_i32_1 = arith.constant 0 : i32
    return %c0_i32, %c0_i32_0 : i32, i32
  }
  func.func @transform_2(%arg0: i32) -> (i32, i32) {
    %c0_i32 = arith.constant 0 : i32
    %c0_i32_0 = arith.constant 0 : i32
    %c0_i32_1 = arith.constant 0 : i32
    return %c0_i32, %c0_i32_0 : i32, i32
  }
  func.func @transform_3(%arg0: i32) -> (i32, i32) {
    %c0_i32 = arith.constant 0 : i32
    %c0_i32_0 = arith.constant 0 : i32
    %c0_i32_1 = arith.constant 0 : i32
    return %c0_i32, %c0_i32_0 : i32, i32
  }
}

</mosaic_0001>

<llo_original>
// kernel: tpu_custom_call.1
$region0: #{tpu_custom_call.1}
  #allocation0 [shape = 'u32[]', space=smem, size = 0x4, offset = 0x4, fixed_abs, tag = 'smem constant byte address 0x4 - core index']
  #allocation1 [shape = 'u32[144,128]{1,0:T(1,128)}', space=vmem, size = 0x12000, scoped, tag = 'internal scratch']
  %s0 = inlined_call_operand.vmem [shape: f32[16,8], index: 0, kind: input, shape index: {}]
  %s1 = inlined_call_operand.vmem [shape: f32[16,32], index: 1, kind: input, shape index: {}]
  %s2 = inlined_call_operand.hbm [shape: f32[1208,128], index: 2, kind: input, shape index: {}]
  %s3 = inlined_call_operand.vmem [shape: f32[16,5], index: 3, kind: output, shape index: {}]
  %s4 = sld [smem:[#allocation0]]
  $region26: #{tpu_custom_call.1} parent=0
    _
  %s6 = ssub.s32 1, %s4
  %s7 = scalar_select 0, %s6, %s4
  $region1: #{tpu_custom_call.1} parent=0
    #allocation2 [shape = 'u8[618496]{0}', space=vmem, size = 0x97000, scoped, tag = 'input window, operand 2, single buffered']
    #allocation3 [shape = 's32[1]{0}', space=sflag, size = 0x4, scoped, tag = 'scoped memory for tpu_custom_call.1']
    %8 = vsyncpa [#allocation3], 0
    // Predicated region
    $region2: #{tpu_custom_call.1} parent=1 // pred_check
      _
    $region3: #{tpu_custom_call.1} parent=1 // pred_check_branch
      %10 = sbr.rel (0) target = $region5
    $region4: #{tpu_custom_call.1} parent=1 // pred_region
      _
    $region5: #{tpu_custom_call.1} parent=1 // pred_fallthru
      _
    // Predicated region
    $region6: #{tpu_custom_call.1} parent=1 // pred_check
      _
    $region7: #{tpu_custom_call.1} parent=1 // pred_check_branch
      %12 = sbr.rel (0) target = $region9
    $region8: #{tpu_custom_call.1} parent=1 // pred_region
      _
    $region9: #{tpu_custom_call.1} parent=1 // pred_fallthru
      _
    // Predicated region
    $region10: #{tpu_custom_call.1} parent=1 // pred_check
      _
    $region11: #{tpu_custom_call.1} parent=1 // pred_check_branch
      %14 = sbr.rel (0) target = $region13
    $region12: #{tpu_custom_call.1} parent=1 // pred_region
      %s16 = ssub.s32 19328, 19328
      %17 = vsyncadd [#allocation3], %s16
      %s18 = sshll.u32 [#allocation2], 4
      %s19 = int_to_ptr.vmem [resolvable:$true] %s18
      %24 = dma.hbm_to_vmem [thread:$0]  %s2, 19328, %s19, [#allocation3], 128, 128, 8
    $region13: #{tpu_custom_call.1} parent=1 // pred_fallthru
      _
    // Predicated region
    $region14: #{tpu_custom_call.1} parent=1 // pred_check
      _
    $region15: #{tpu_custom_call.1} parent=1 // pred_check_branch
      %26 = sbr.rel (0) target = $region17
    $region16: #{tpu_custom_call.1} parent=1 // pred_region
      %27 = dma.done [#allocation3], 19328
    $region17: #{tpu_custom_call.1} parent=1 // pred_fallthru
      _
    %v28 = vld [vmem:[%s0] sm:$0xff]
    %v29 = vld [vmem:[%s0 + $0x8] sm:$0xff]
    %v30 = vld [vmem:[#allocation2] sm:$0xff]
    %v31 = vld [vmem:[#allocation2 + $0x4a8] sm:$0x1]
    %v32 = vlaneseq
    %v33 = vshrl.u32 %v32, 7
    %v34 = vsub.s32 0, %v33
    %v35 = vrot.slane %v31, %v34
    %vm36 = vcmask 64512
    %v38 = vsel %vm36, %v28, 0
    %v41 = vsel %vm36, %v29, 0
    %43 = vmatprep.subr.mxu0 0.0
    %44 = vmatpush1.msra.mxu0 0.0
    %45 = vmatprep.subr.mxu0 0.0
    %46 = vmatpush1.msra.mxu0 0.0
    %47 = vmatprep.subr.mxu0 0.0
    %48 = vmatpush1.msra.mxu0 0.0
    %49 = vmatprep.subr.mxu0 0.0
    %50 = vmatpush1.msra.mxu0 0.0
    %51 = vmatprep.subr.mxu0 0.0
    %52 = vmatpush1.msra.mxu0 0.0
    %53 = vmatprep.subr.mxu0 0.0
    %54 = vmatpush1.msra.mxu0 0.0
    %55 = vmatprep.subr.mxu0 0.0
    %56 = vmatpush1.msra.mxu0 0.0
    %57 = vmatprep.subr.mxu0 0.0
    %58 = vmatpush1.msra.mxu0 0.0
    %59 = vmatprep.subr.mxu0 0.0
    %60 = vmatpush1.msra.mxu0 0.0
    %61 = vmatprep.subr.mxu0 0.0
    %62 = vmatpush1.msra.mxu0 0.0
    %63 = vmatprep.subr.mxu0 0.0
    %64 = vmatpush1.msra.mxu0 0.0
    %65 = vmatprep.subr.mxu0 0.0
    %66 = vmatpush1.msra.mxu0 0.0
    %67 = vmatprep.subr.mxu0 0.0
    %68 = vmatpush1.msra.mxu0 0.0
    %69 = vmatprep.subr.mxu0 0.0
    %70 = vmatpush1.msra.mxu0 0.0
    %71 = vmatprep.subr.mxu0 0.0
    %72 = vmatpush1.msra.mxu0 0.0
    %73 = vmatprep.subr.mxu0 0.0
    %74 = vmatpush1.msra.mxu0 %v30
    %75 = vmatprep.subr.mxu0 0.0
    %76 = vmatpush2.msra.mxu0 0.0
    %77 = vmatprep.subr.mxu0 0.0
    %78 = vmatpush2.msra.mxu0 0.0
    %79 = vmatprep.subr.mxu0 0.0
    %80 = vmatpush2.msra.mxu0 0.0
    %81 = vmatprep.subr.mxu0 0.0
    %82 = vmatpush2.msra.mxu0 0.0
    %83 = vmatprep.subr.mxu0 0.0
    %84 = vmatpush2.msra.mxu0 0.0
    %85 = vmatprep.subr.mxu0 0.0
    %86 = vmatpush2.msra.mxu0 0.0
    %87 = vmatprep.subr.mxu0 0.0
    %88 = vmatpush2.msra.mxu0 0.0
    %89 = vmatprep.subr.mxu0 0.0
    %90 = vmatpush2.msra.mxu0 0.0
    %91 = vmatprep.subr.mxu0 0.0
    %92 = vmatpush2.msra.mxu0 0.0
    %93 = vmatprep.subr.mxu0 0.0
    %94 = vmatpush2.msra.mxu0 0.0
    %95 = vmatprep.subr.mxu0 0.0
    %96 = vmatpush2.msra.mxu0 0.0
    %97 = vmatprep.subr.mxu0 0.0
    %98 = vmatpush2.msra.mxu0 0.0
    %99 = vmatprep.subr.mxu0 0.0
    %100 = vmatpush2.msra.mxu0 0.0
    %101 = vmatprep.subr.mxu0 0.0
    %102 = vmatpush2.msra.mxu0 0.0
    %103 = vmatprep.subr.mxu0 0.0
    %104 = vmatpush2.msra.mxu0 0.0
    %105 = vmatprep.subr.mxu0 0.0
    %106 = vmatpush2.msra.mxu0 0.0
    %107 = vmatprep.mubr.f32.mxu0 0.0
    %108 = vmatmul.mubr.f32.gmra.mxu0 %v38
    %v109 = vpop.f32.mrf.mxu0
    %v110 = vadd.f32 %v35, %v109
    %v111 = vpop.f32.mrf.mxu0
    %112 = vmatprep.mubr.f32.mxu0 0.0
    %113 = vmatmul.mubr.f32.gmra.mxu0 %v41
    %v114 = vpop.f32.mrf.mxu0
    %v115 = vadd.f32 %v35, %v114
    %v116 = vpop.f32.mrf.mxu0
    %117 = vdwg.mxu0
    %vm118 = vcmp.gt.f32.partialorder %v110, 0.0
    %vm119 = vcmp.gt.f32.partialorder %v115, 0.0
    %v120 = vmul.f32 %v110, 0.2
    %v121 = vmul.f32 %v115, 0.2
    %v122 = vsel %vm118, %v110, %v120
    %v123 = vsel %vm119, %v115, %v121
    %v124 = vld [vmem:[#allocation2 + $0x8] sm:$0xff]
    %v125 = vld [vmem:[#allocation2 + $0x10] sm:$0xff]
    %v126 = vld [vmem:[#allocation2 + $0x18] sm:$0xff]
    %v127 = vld [vmem:[#allocation2 + $0x20] sm:$0xff]
    %v128 = vld [vmem:[#allocation2 + $0x28] sm:$0xff]
    %v129 = vld [vmem:[#allocation2 + $0x30] sm:$0xff]
    %v130 = vld [vmem:[#allocation2 + $0x38] sm:$0xff]
    %v131 = vld [vmem:[#allocation2 + $0x40] sm:$0xff]
    %v132 = vld [vmem:[#allocation2 + $0x48] sm:$0xff]
    %v133 = vld [vmem:[#allocation2 + $0x50] sm:$0xff]
    %v134 = vld [vmem:[#allocation2 + $0x58] sm:$0xff]
    %v135 = vld [vmem:[#allocation2 + $0x60] sm:$0xff]
    %v136 = vld [vmem:[#allocation2 + $0x68] sm:$0xff]
    %v137 = vld [vmem:[#allocation2 + $0x70] sm:$0xff]
    %v138 = vld [vmem:[#allocation2 + $0x78] sm:$0xff]
    %v139 = vld [vmem:[#allocation2 + $0x80] sm:$0xff]
    %v140 = vld [vmem:[#allocation2 + $0x4a9] sm:$0x1]
    %v141 = vlaneseq
    %v142 = vshrl.u32 %v141, 7
    %v143 = vsub.s32 0, %v142
    %v144 = vrot.slane %v140, %v143
    %145 = vmatprep.subr.mxu0 0.0
    %146 = vmatpush1.msra.mxu0 %v139
    %147 = vmatprep.subr.mxu0 0.0
    %148 = vmatpush1.msra.mxu0 %v138
    %149 = vmatprep.subr.mxu0 0.0
    %150 = vmatpush1.msra.mxu0 %v137
    %151 = vmatprep.subr.mxu0 0.0
    %152 = vmatpush1.msra.mxu0 %v136
    %153 = vmatprep.subr.mxu0 0.0
    %154 = vmatpush1.msra.mxu0 %v135
    %155 = vmatprep.subr.mxu0 0.0
    %156 = vmatpush1.msra.mxu0 %v134
    %157 = vmatprep.subr.mxu0 0.0
    %158 = vmatpush1.msra.mxu0 %v133
    %159 = vmatprep.subr.mxu0 0.0
    %160 = vmatpush1.msra.mxu0 %v132
    %161 = vmatprep.subr.mxu0 0.0
    %162 = vmatpush1.msra.mxu0 %v131
    %163 = vmatprep.subr.mxu0 0.0
    %164 = vmatpush1.msra.mxu0 %v130
    %165 = vmatprep.subr.mxu0 0.0
    %166 = vmatpush1.msra.mxu0 %v129
    %167 = vmatprep.subr.mxu0 0.0
    %168 = vmatpush1.msra.mxu0 %v128
    %169 = vmatprep.subr.mxu0 0.0
    %170 = vmatpush1.msra.mxu0 %v127
    %171 = vmatprep.subr.mxu0 0.0
    %172 = vmatpush1.msra.mxu0 %v126
    %173 = vmatprep.subr.mxu0 0.0
    %174 = vmatpush1.msra.mxu0 %v125
    %175 = vmatprep.subr.mxu0 0.0
    %176 = vmatpush1.msra.mxu0 %v124
    %177 = vmatprep.subr.mxu0 0.0
    %178 = vmatpush2.msra.mxu0 0.0
    %179 = vmatprep.subr.mxu0 0.0
    %180 = vmatpush2.msra.mxu0 0.0
    %181 = vmatprep.subr.mxu0 0.0
    %182 = vmatpush2.msra.mxu0 0.0
    %183 = vmatprep.subr.mxu0 0.0
    %184 = vmatpush2.msra.mxu0 0.0
    %185 = vmatprep.subr.mxu0 0.0
    %186 = vmatpush2.msra.mxu0 0.0
    %187 = vmatprep.subr.mxu0 0.0
    %188 = vmatpush2.msra.mxu0 0.0
    %189 = vmatprep.subr.mxu0 0.0
    %190 = vmatpush2.msra.mxu0 0.0
    %191 = vmatprep.subr.mxu0 0.0
    %192 = vmatpush2.msra.mxu0 0.0
    %193 = vmatprep.subr.mxu0 0.0
    %194 = vmatpush2.msra.mxu0 0.0
    %195 = vmatprep.subr.mxu0 0.0
    %196 = vmatpush2.msra.mxu0 0.0
    %197 = vmatprep.subr.mxu0 0.0
    %198 = vmatpush2.msra.mxu0 0.0
    %199 = vmatprep.subr.mxu0 0.0
    %200 = vmatpush2.msra.mxu0 0.0
    %201 = vmatprep.subr.mxu0 0.0
    %202 = vmatpush2.msra.mxu0 0.0
    %203 = vmatprep.subr.mxu0 0.0
    %204 = vmatpush2.msra.mxu0 0.0
    %205 = vmatprep.subr.mxu0 0.0
    %206 = vmatpush2.msra.mxu0 0.0
    %207 = vmatprep.subr.mxu0 0.0
    %208 = vmatpush2.msra.mxu0 0.0
    %209 = vmatprep.mubr.f32.mxu0 0.0
    %210 = vmatmul.mubr.f32.gmra.mxu0 %v122
    %v211 = vpop.f32.mrf.mxu0
    %v212 = vadd.f32 %v144, %v211
    %v213 = vpop.f32.mrf.mxu0
    %214 = vmatprep.mubr.f32.mxu0 0.0
    %215 = vmatmul.mubr.f32.gmra.mxu0 %v123
    %v216 = vpop.f32.mrf.mxu0
    %v217 = vadd.f32 %v144, %v216
    %v218 = vpop.f32.mrf.mxu0
    %219 = vdwg.mxu0
    %vm220 = vcmp.gt.f32.partialorder %v212, 0.0
    %vm221 = vcmp.gt.f32.partialorder %v217, 0.0
    %v222 = vmul.f32 %v212, 0.2
    %v223 = vmul.f32 %v217, 0.2
    %v224 = vsel %vm220, %v212, %v222
    %v225 = vsel %vm221, %v217, %v223
    %v226 = vld [vmem:[#allocation2 + $0x88] sm:$0xff]
    %v227 = vld [vmem:[#allocation2 + $0x90] sm:$0xff]
    %v228 = vld [vmem:[#allocation2 + $0x98] sm:$0xff]
    %v229 = vld [vmem:[#allocation2 + $0xa0] sm:$0xff]
    %v230 = vld [vmem:[#allocation2 + $0xa8] sm:$0xff]
    %v231 = vld [vmem:[#allocation2 + $0xb0] sm:$0xff]
    %v232 = vld [vmem:[#allocation2 + $0xb8] sm:$0xff]
    %v233 = vld [vmem:[#allocation2 + $0xc0] sm:$0xff]
    %v234 = vld [vmem:[#allocation2 + $0xc8] sm:$0xff]
    %v235 = vld [vmem:[#allocation2 + $0xd0] sm:$0xff]
    %v236 = vld [vmem:[#allocation2 + $0xd8] sm:$0xff]
    %v237 = vld [vmem:[#allocation2 + $0xe0] sm:$0xff]
    %v238 = vld [vmem:[#allocation2 + $0xe8] sm:$0xff]
    %v239 = vld [vmem:[#allocation2 + $0xf0] sm:$0xff]
    %v240 = vld [vmem:[#allocation2 + $0xf8] sm:$0xff]
    %v241 = vld [vmem:[#allocation2 + $0x100] sm:$0xff]
    %v242 = vld [vmem:[#allocation2 + $0x4aa] sm:$0x1]
    %v243 = vlaneseq
    %v244 = vshrl.u32 %v243, 7
    %v245 = vsub.s32 0, %v244
    %v246 = vrot.slane %v242, %v245
    %247 = vmatprep.subr.mxu0 0.0
    %248 = vmatpush1.msra.mxu0 %v241
    %249 = vmatprep.subr.mxu0 0.0
    %250 = vmatpush1.msra.mxu0 %v240
    %251 = vmatprep.subr.mxu0 0.0
    %252 = vmatpush1.msra.mxu0 %v239
    %253 = vmatprep.subr.mxu0 0.0
    %254 = vmatpush1.msra.mxu0 %v238
    %255 = vmatprep.subr.mxu0 0.0
    %256 = vmatpush1.msra.mxu0 %v237
    %257 = vmatprep.subr.mxu0 0.0
    %258 = vmatpush1.msra.mxu0 %v236
    %259 = vmatprep.subr.mxu0 0.0
    %260 = vmatpush1.msra.mxu0 %v235
    %261 = vmatprep.subr.mxu0 0.0
    %262 = vmatpush1.msra.mxu0 %v234
    %263 = vmatprep.subr.mxu0 0.0
    %264 = vmatpush1.msra.mxu0 %v233
    %265 = vmatprep.subr.mxu0 0.0
    %266 = vmatpush1.msra.mxu0 %v232
    %267 = vmatprep.subr.mxu0 0.0
    %268 = vmatpush1.msra.mxu0 %v231
    %269 = vmatprep.subr.mxu0 0.0
    %270 = vmatpush1.msra.mxu0 %v230
    %271 = vmatprep.subr.mxu0 0.0
    %272 = vmatpush1.msra.mxu0 %v229
    %273 = vmatprep.subr.mxu0 0.0
    %274 = vmatpush1.msra.mxu0 %v228
    %275 = vmatprep.subr.mxu0 0.0
    %276 = vmatpush1.msra.mxu0 %v227
    %277 = vmatprep.subr.mxu0 0.0
    %278 = vmatpush1.msra.mxu0 %v226
    %279 = vmatprep.subr.mxu0 0.0
    %280 = vmatpush2.msra.mxu0 0.0
    %281 = vmatprep.subr.mxu0 0.0
    %282 = vmatpush2.msra.mxu0 0.0
    %283 = vmatprep.subr.mxu0 0.0
    %284 = vmatpush2.msra.mxu0 0.0
    %285 = vmatprep.subr.mxu0 0.0
    %286 = vmatpush2.msra.mxu0 0.0
    %287 = vmatprep.subr.mxu0 0.0
    %288 = vmatpush2.msra.mxu0 0.0
    %289 = vmatprep.subr.mxu0 0.0
    %290 = vmatpush2.msra.mxu0 0.0
    %291 = vmatprep.subr.mxu0 0.0
    %292 = vmatpush2.msra.mxu0 0.0
    %293 = vmatprep.subr.mxu0 0.0
    %294 = vmatpush2.msra.mxu0 0.0
    %295 = vmatprep.subr.mxu0 0.0
    %296 = vmatpush2.msra.mxu0 0.0
    %297 = vmatprep.subr.mxu0 0.0
    %298 = vmatpush2.msra.mxu0 0.0
    %299 = vmatprep.subr.mxu0 0.0
    %300 = vmatpush2.msra.mxu0 0.0
    %301 = vmatprep.subr.mxu0 0.0
    %302 = vmatpush2.msra.mxu0 0.0
    %303 = vmatprep.subr.mxu0 0.0
    %304 = vmatpush2.msra.mxu0 0.0
    %305 = vmatprep.subr.mxu0 0.0
    %306 = vmatpush2.msra.mxu0 0.0
    %307 = vmatprep.subr.mxu0 0.0
    %308 = vmatpush2.msra.mxu0 0.0
    %309 = vmatprep.subr.mxu0 0.0
    %310 = vmatpush2.msra.mxu0 0.0
    %311 = vmatprep.mubr.f32.mxu0 0.0
    %312 = vmatmul.mubr.f32.gmra.mxu0 %v224
    %v313 = vpop.f32.mrf.mxu0
    %v314 = vadd.f32 %v246, %v313
    %v315 = vpop.f32.mrf.mxu0
    %316 = vmatprep.mubr.f32.mxu0 0.0
    %317 = vmatmul.mubr.f32.gmra.mxu0 %v225
    %v318 = vpop.f32.mrf.mxu0
    %v319 = vadd.f32 %v246, %v318
    %v320 = vpop.f32.mrf.mxu0
    %321 = vdwg.mxu0
    %v322 = vld [vmem:[%s1] sm:$0xff]
    %v323 = vld [vmem:[%s1 + $0x8] sm:$0xff]
    %v324 = vld [vmem:[#allocation2 + $0x108] sm:$0xff]
    %v325 = vld [vmem:[#allocation2 + $0x110] sm:$0xff]
    %v326 = vld [vmem:[#allocation2 + $0x118] sm:$0xff]
    %v327 = vld [vmem:[#allocation2 + $0x120] sm:$0xff]
    %v328 = vld [vmem:[#allocation2 + $0x4ab] sm:$0x1]
    %v329 = vlaneseq
    %v330 = vshrl.u32 %v329, 7
    %v331 = vsub.s32 0, %v330
    %v332 = vrot.slane %v328, %v331
    %vm333 = vcmask 261120
    %v335 = vsel %vm333, %v322, 0
    %v338 = vsel %vm333, %v323, 0
    %340 = vmatprep.subr.mxu0 0.0
    %341 = vmatpush1.msra.mxu0 0.0
    %342 = vmatprep.subr.mxu0 0.0
    %343 = vmatpush1.msra.mxu0 0.0
    %344 = vmatprep.subr.mxu0 0.0
    %345 = vmatpush1.msra.mxu0 0.0
    %346 = vmatprep.subr.mxu0 0.0
    %347 = vmatpush1.msra.mxu0 0.0
    %348 = vmatprep.subr.mxu0 0.0
    %349 = vmatpush1.msra.mxu0 0.0
    %350 = vmatprep.subr.mxu0 0.0
    %351 = vmatpush1.msra.mxu0 0.0
    %352 = vmatprep.subr.mxu0 0.0
    %353 = vmatpush1.msra.mxu0 0.0
    %354 = vmatprep.subr.mxu0 0.0
    %355 = vmatpush1.msra.mxu0 0.0
    %356 = vmatprep.subr.mxu0 0.0
    %357 = vmatpush1.msra.mxu0 0.0
    %358 = vmatprep.subr.mxu0 0.0
    %359 = vmatpush1.msra.mxu0 0.0
    %360 = vmatprep.subr.mxu0 0.0
    %361 = vmatpush1.msra.mxu0 0.0
    %362 = vmatprep.subr.mxu0 0.0
    %363 = vmatpush1.msra.mxu0 0.0
    %364 = vmatprep.subr.mxu0 0.0
    %365 = vmatpush1.msra.mxu0 %v327
    %366 = vmatprep.subr.mxu0 0.0
    %367 = vmatpush1.msra.mxu0 %v326
    %368 = vmatprep.subr.mxu0 0.0
    %369 = vmatpush1.msra.mxu0 %v325
    %370 = vmatprep.subr.mxu0 0.0
    %371 = vmatpush1.msra.mxu0 %v324
    %372 = vmatprep.subr.mxu0 0.0
    %373 = vmatpush2.msra.mxu0 0.0
    %374 = vmatprep.subr.mxu0 0.0
    %375 = vmatpush2.msra.mxu0 0.0
    %376 = vmatprep.subr.mxu0 0.0
    %377 = vmatpush2.msra.mxu0 0.0
    %378 = vmatprep.subr.mxu0 0.0
    %379 = vmatpush2.msra.mxu0 0.0
    %380 = vmatprep.subr.mxu0 0.0
    %381 = vmatpush2.msra.mxu0 0.0
    %382 = vmatprep.subr.mxu0 0.0
    %383 = vmatpush2.msra.mxu0 0.0
    %384 = vmatprep.subr.mxu0 0.0
    %385 = vmatpush2.msra.mxu0 0.0
    %386 = vmatprep.subr.mxu0 0.0
    %387 = vmatpush2.msra.mxu0 0.0
    %388 = vmatprep.subr.mxu0 0.0
    %389 = vmatpush2.msra.mxu0 0.0
    %390 = vmatprep.subr.mxu0 0.0
    %391 = vmatpush2.msra.mxu0 0.0
    %392 = vmatprep.subr.mxu0 0.0
    %393 = vmatpush2.msra.mxu0 0.0
    %394 = vmatprep.subr.mxu0 0.0
    %395 = vmatpush2.msra.mxu0 0.0
    %396 = vmatprep.subr.mxu0 0.0
    %397 = vmatpush2.msra.mxu0 0.0
    %398 = vmatprep.subr.mxu0 0.0
    %399 = vmatpush2.msra.mxu0 0.0
    %400 = vmatprep.subr.mxu0 0.0
    %401 = vmatpush2.msra.mxu0 0.0
    %402 = vmatprep.subr.mxu0 0.0
    %403 = vmatpush2.msra.mxu0 0.0
    %404 = vmatprep.mubr.f32.mxu0 0.0
    %405 = vmatmul.mubr.f32.gmra.mxu0 %v335
    %v406 = vpop.f32.mrf.mxu0
    %v407 = vadd.f32 %v332, %v406
    %v408 = vpop.f32.mrf.mxu0
    %409 = vmatprep.mubr.f32.mxu0 0.0
    %410 = vmatmul.mubr.f32.gmra.mxu0 %v338
    %v411 = vpop.f32.mrf.mxu0
    %v412 = vadd.f32 %v332, %v411
    %v413 = vpop.f32.mrf.mxu0
    %414 = vdwg.mxu0
    %vm415 = vcmp.gt.f32.partialorder %v407, 0.0
    %vm416 = vcmp.gt.f32.partialorder %v412, 0.0
    %v417 = vmul.f32 %v407, 0.2
    %v418 = vmul.f32 %v412, 0.2
    %v419 = vsel %vm415, %v407, %v417
    %v420 = vsel %vm416, %v412, %v418
    %v421 = vld [vmem:[#allocation2 + $0x128] sm:$0xff]
    %v422 = vld [vmem:[#allocation2 + $0x130] sm:$0xff]
    %v423 = vld [vmem:[#allocation2 + $0x138] sm:$0xff]
    %v424 = vld [vmem:[#allocation2 + $0x140] sm:$0xff]
    %v425 = vld [vmem:[#allocation2 + $0x148] sm:$0xff]
    %v426 = vld [vmem:[#allocation2 + $0x150] sm:$0xff]
    %v427 = vld [vmem:[#allocation2 + $0x158] sm:$0xff]
    %v428 = vld [vmem:[#allocation2 + $0x160] sm:$0xff]
    %v429 = vld [vmem:[#allocation2 + $0x168] sm:$0xff]
    %v430 = vld [vmem:[#allocation2 + $0x170] sm:$0xff]
    %v431 = vld [vmem:[#allocation2 + $0x178] sm:$0xff]
    %v432 = vld [vmem:[#allocation2 + $0x180] sm:$0xff]
    %v433 = vld [vmem:[#allocation2 + $0x188] sm:$0xff]
    %v434 = vld [vmem:[#allocation2 + $0x190] sm:$0xff]
    %v435 = vld [vmem:[#allocation2 + $0x198] sm:$0xff]
    %v436 = vld [vmem:[#allocation2 + $0x1a0] sm:$0xff]
    %v437 = vld [vmem:[#allocation2 + $0x4ac] sm:$0x1]
    %v438 = vlaneseq
    %v439 = vshrl.u32 %v438, 7
    %v440 = vsub.s32 0, %v439
    %v441 = vrot.slane %v437, %v440
    %442 = vmatprep.subr.mxu0 0.0
    %443 = vmatpush1.msra.mxu0 %v436
    %444 = vmatprep.subr.mxu0 0.0
    %445 = vmatpush1.msra.mxu0 %v435
    %446 = vmatprep.subr.mxu0 0.0
    %447 = vmatpush1.msra.mxu0 %v434
    %448 = vmatprep.subr.mxu0 0.0
    %449 = vmatpush1.msra.mxu0 %v433
    %450 = vmatprep.subr.mxu0 0.0
    %451 = vmatpush1.msra.mxu0 %v432
    %452 = vmatprep.subr.mxu0 0.0
    %453 = vmatpush1.msra.mxu0 %v431
    %454 = vmatprep.subr.mxu0 0.0
    %455 = vmatpush1.msra.mxu0 %v430
    %456 = vmatprep.subr.mxu0 0.0
    %457 = vmatpush1.msra.mxu0 %v429
    %458 = vmatprep.subr.mxu0 0.0
    %459 = vmatpush1.msra.mxu0 %v428
    %460 = vmatprep.subr.mxu0 0.0
    %461 = vmatpush1.msra.mxu0 %v427
    %462 = vmatprep.subr.mxu0 0.0
    %463 = vmatpush1.msra.mxu0 %v426
    %464 = vmatprep.subr.mxu0 0.0
    %465 = vmatpush1.msra.mxu0 %v425
    %466 = vmatprep.subr.mxu0 0.0
    %467 = vmatpush1.msra.mxu0 %v424
    %468 = vmatprep.subr.mxu0 0.0
    %469 = vmatpush1.msra.mxu0 %v423
    %470 = vmatprep.subr.mxu0 0.0
    %471 = vmatpush1.msra.mxu0 %v422
    %472 = vmatprep.subr.mxu0 0.0
    %473 = vmatpush1.msra.mxu0 %v421
    %474 = vmatprep.subr.mxu0 0.0
    %475 = vmatpush2.msra.mxu0 0.0
    %476 = vmatprep.subr.mxu0 0.0
    %477 = vmatpush2.msra.mxu0 0.0
    %478 = vmatprep.subr.mxu0 0.0
    %479 = vmatpush2.msra.mxu0 0.0
    %480 = vmatprep.subr.mxu0 0.0
    %481 = vmatpush2.msra.mxu0 0.0
    %482 = vmatprep.subr.mxu0 0.0
    %483 = vmatpush2.msra.mxu0 0.0
    %484 = vmatprep.subr.mxu0 0.0
    %485 = vmatpush2.msra.mxu0 0.0
    %486 = vmatprep.subr.mxu0 0.0
    %487 = vmatpush2.msra.mxu0 0.0
    %488 = vmatprep.subr.mxu0 0.0
    %489 = vmatpush2.msra.mxu0 0.0
    %490 = vmatprep.subr.mxu0 0.0
    %491 = vmatpush2.msra.mxu0 0.0
    %492 = vmatprep.subr.mxu0 0.0
    %493 = vmatpush2.msra.mxu0 0.0
    %494 = vmatprep.subr.mxu0 0.0
    %495 = vmatpush2.msra.mxu0 0.0
    %496 = vmatprep.subr.mxu0 0.0
    %497 = vmatpush2.msra.mxu0 0.0
    %498 = vmatprep.subr.mxu0 0.0
    %499 = vmatpush2.msra.mxu0 0.0
    %500 = vmatprep.subr.mxu0 0.0
    %501 = vmatpush2.msra.mxu0 0.0
    %502 = vmatprep.subr.mxu0 0.0
    %503 = vmatpush2.msra.mxu0 0.0
    %504 = vmatprep.subr.mxu0 0.0
    %505 = vmatpush2.msra.mxu0 0.0
    %506 = vmatprep.mubr.f32.mxu0 0.0
    %507 = vmatmul.mubr.f32.gmra.mxu0 %v419
    %v508 = vpop.f32.mrf.mxu0
    %v509 = vadd.f32 %v441, %v508
    %v510 = vpop.f32.mrf.mxu0
    %511 = vmatprep.mubr.f32.mxu0 0.0
    %512 = vmatmul.mubr.f32.gmra.mxu0 %v420
    %v513 = vpop.f32.mrf.mxu0
    %v514 = vadd.f32 %v441, %v513
    %v515 = vpop.f32.mrf.mxu0
    %516 = vdwg.mxu0
    %vm517 = vcmp.gt.f32.partialorder %v509, 0.0
    %vm518 = vcmp.gt.f32.partialorder %v514, 0.0
    %v519 = vmul.f32 %v509, 0.2
    %v520 = vmul.f32 %v514, 0.2
    %v521 = vsel %vm517, %v509, %v519
    %v522 = vsel %vm518, %v514, %v520
    %v523 = vld [vmem:[#allocation2 + $0x1a8] sm:$0xff]
    %v524 = vld [vmem:[#allocation2 + $0x1b0] sm:$0xff]
    %v525 = vld [vmem:[#allocation2 + $0x1b8] sm:$0xff]
    %v526 = vld [vmem:[#allocation2 + $0x1c0] sm:$0xff]
    %v527 = vld [vmem:[#allocation2 + $0x1c8] sm:$0xff]
    %v528 = vld [vmem:[#allocation2 + $0x1d0] sm:$0xff]
    %v529 = vld [vmem:[#allocation2 + $0x1d8] sm:$0xff]
    %v530 = vld [vmem:[#allocation2 + $0x1e0] sm:$0xff]
    %v531 = vld [vmem:[#allocation2 + $0x1e8] sm:$0xff]
    %v532 = vld [vmem:[#allocation2 + $0x1f0] sm:$0xff]
    %v533 = vld [vmem:[#allocation2 + $0x1f8] sm:$0xff]
    %v534 = vld [vmem:[#allocation2 + $0x200] sm:$0xff]
    %v535 = vld [vmem:[#allocation2 + $0x208] sm:$0xff]
    %v536 = vld [vmem:[#allocation2 + $0x210] sm:$0xff]
    %v537 = vld [vmem:[#allocation2 + $0x218] sm:$0xff]
    %v538 = vld [vmem:[#allocation2 + $0x220] sm:$0xff]
    %v539 = vld [vmem:[#allocation2 + $0x4ad] sm:$0x1]
    %v540 = vlaneseq
    %v541 = vshrl.u32 %v540, 7
    %v542 = vsub.s32 0, %v541
    %v543 = vrot.slane %v539, %v542
    %544 = vmatprep.subr.mxu0 0.0
    %545 = vmatpush1.msra.mxu0 %v538
    %546 = vmatprep.subr.mxu0 0.0
    %547 = vmatpush1.msra.mxu0 %v537
    %548 = vmatprep.subr.mxu0 0.0
    %549 = vmatpush1.msra.mxu0 %v536
    %550 = vmatprep.subr.mxu0 0.0
    %551 = vmatpush1.msra.mxu0 %v535
    %552 = vmatprep.subr.mxu0 0.0
    %553 = vmatpush1.msra.mxu0 %v534
    %554 = vmatprep.subr.mxu0 0.0
    %555 = vmatpush1.msra.mxu0 %v533
    %556 = vmatprep.subr.mxu0 0.0
    %557 = vmatpush1.msra.mxu0 %v532
    %558 = vmatprep.subr.mxu0 0.0
    %559 = vmatpush1.msra.mxu0 %v531
    %560 = vmatprep.subr.mxu0 0.0
    %561 = vmatpush1.msra.mxu0 %v530
    %562 = vmatprep.subr.mxu0 0.0
    %563 = vmatpush1.msra.mxu0 %v529
    %564 = vmatprep.subr.mxu0 0.0
    %565 = vmatpush1.msra.mxu0 %v528
    %566 = vmatprep.subr.mxu0 0.0
    %567 = vmatpush1.msra.mxu0 %v527
    %568 = vmatprep.subr.mxu0 0.0
    %569 = vmatpush1.msra.mxu0 %v526
    %570 = vmatprep.subr.mxu0 0.0
    %571 = vmatpush1.msra.mxu0 %v525
    %572 = vmatprep.subr.mxu0 0.0
    %573 = vmatpush1.msra.mxu0 %v524
    %574 = vmatprep.subr.mxu0 0.0
    %575 = vmatpush1.msra.mxu0 %v523
    %576 = vmatprep.subr.mxu0 0.0
    %577 = vmatpush2.msra.mxu0 0.0
    %578 = vmatprep.subr.mxu0 0.0
    %579 = vmatpush2.msra.mxu0 0.0
    %580 = vmatprep.subr.mxu0 0.0
    %581 = vmatpush2.msra.mxu0 0.0
    %582 = vmatprep.subr.mxu0 0.0
    %583 = vmatpush2.msra.mxu0 0.0
    %584 = vmatprep.subr.mxu0 0.0
    %585 = vmatpush2.msra.mxu0 0.0
    %586 = vmatprep.subr.mxu0 0.0
    %587 = vmatpush2.msra.mxu0 0.0
    %588 = vmatprep.subr.mxu0 0.0
    %589 = vmatpush2.msra.mxu0 0.0
    %590 = vmatprep.subr.mxu0 0.0
    %591 = vmatpush2.msra.mxu0 0.0
    %592 = vmatprep.subr.mxu0 0.0
    %593 = vmatpush2.msra.mxu0 0.0
    %594 = vmatprep.subr.mxu0 0.0
    %595 = vmatpush2.msra.mxu0 0.0
    %596 = vmatprep.subr.mxu0 0.0
    %597 = vmatpush2.msra.mxu0 0.0
    %598 = vmatprep.subr.mxu0 0.0
    %599 = vmatpush2.msra.mxu0 0.0
    %600 = vmatprep.subr.mxu0 0.0
    %601 = vmatpush2.msra.mxu0 0.0
    %602 = vmatprep.subr.mxu0 0.0
    %603 = vmatpush2.msra.mxu0 0.0
    %604 = vmatprep.subr.mxu0 0.0
    %605 = vmatpush2.msra.mxu0 0.0
    %606 = vmatprep.subr.mxu0 0.0
    %607 = vmatpush2.msra.mxu0 0.0
    %608 = vmatprep.mubr.f32.mxu0 0.0
    %609 = vmatmul.mubr.f32.gmra.mxu0 %v521
    %v610 = vpop.f32.mrf.mxu0
    %v611 = vadd.f32 %v543, %v610
    %v612 = vpop.f32.mrf.mxu0
    %613 = vmatprep.mubr.f32.mxu0 0.0
    %614 = vmatmul.mubr.f32.gmra.mxu0 %v522
    %v615 = vpop.f32.mrf.mxu0
    %v616 = vadd.f32 %v543, %v615
    %v617 = vpop.f32.mrf.mxu0
    %618 = vdwg.mxu0
    %v619 = vld [vmem:[#allocation2 + $0x228] sm:$0xff]
    %v620 = vld [vmem:[#allocation2 + $0x230] sm:$0xff]
    %v621 = vld [vmem:[#allocation2 + $0x238] sm:$0xff]
    %v622 = vld [vmem:[#allocation2 + $0x240] sm:$0xff]
    %v623 = vld [vmem:[#allocation2 + $0x248] sm:$0xff]
    %v624 = vld [vmem:[#allocation2 + $0x250] sm:$0xff]
    %v625 = vld [vmem:[#allocation2 + $0x258] sm:$0xff]
    %v626 = vld [vmem:[#allocation2 + $0x260] sm:$0xff]
    %v627 = vld [vmem:[#allocation2 + $0x268] sm:$0xff]
    %v628 = vld [vmem:[#allocation2 + $0x270] sm:$0xff]
    %v629 = vld [vmem:[#allocation2 + $0x278] sm:$0xff]
    %v630 = vld [vmem:[#allocation2 + $0x280] sm:$0xff]
    %v631 = vld [vmem:[#allocation2 + $0x288] sm:$0xff]
    %v632 = vld [vmem:[#allocation2 + $0x290] sm:$0xff]
    %v633 = vld [vmem:[#allocation2 + $0x298] sm:$0xff]
    %v634 = vld [vmem:[#allocation2 + $0x2a0] sm:$0xff]
    %v635 = vld [vmem:[#allocation2 + $0x2a8] sm:$0xff]
    %v636 = vld [vmem:[#allocation2 + $0x2b0] sm:$0xff]
    %v637 = vld [vmem:[#allocation2 + $0x2b8] sm:$0xff]
    %v638 = vld [vmem:[#allocation2 + $0x2c0] sm:$0xff]
    %v639 = vld [vmem:[#allocation2 + $0x2c8] sm:$0xff]
    %v640 = vld [vmem:[#allocation2 + $0x2d0] sm:$0xff]
    %v641 = vld [vmem:[#allocation2 + $0x2d8] sm:$0xff]
    %v642 = vld [vmem:[#allocation2 + $0x2e0] sm:$0xff]
    %v643 = vld [vmem:[#allocation2 + $0x2e8] sm:$0xff]
    %v644 = vld [vmem:[#allocation2 + $0x2f0] sm:$0xff]
    %v645 = vld [vmem:[#allocation2 + $0x2f8] sm:$0xff]
    %v646 = vld [vmem:[#allocation2 + $0x300] sm:$0xff]
    %v647 = vld [vmem:[#allocation2 + $0x308] sm:$0xff]
    %v648 = vld [vmem:[#allocation2 + $0x310] sm:$0xff]
    %v649 = vld [vmem:[#allocation2 + $0x318] sm:$0xff]
    %v650 = vld [vmem:[#allocation2 + $0x320] sm:$0xff]
    %651 = vmatprep.subr.mxu0 0.0
    %652 = vmatpush1.msra.mxu0 %v650
    %653 = vmatprep.subr.mxu0 0.0
    %654 = vmatpush1.msra.mxu0 %v649
    %655 = vmatprep.subr.mxu0 0.0
    %656 = vmatpush1.msra.mxu0 %v648
    %657 = vmatprep.subr.mxu0 0.0
    %658 = vmatpush1.msra.mxu0 %v647
    %659 = vmatprep.subr.mxu0 0.0
    %660 = vmatpush1.msra.mxu0 %v646
    %661 = vmatprep.subr.mxu0 0.0
    %662 = vmatpush1.msra.mxu0 %v645
    %663 = vmatprep.subr.mxu0 0.0
    %664 = vmatpush1.msra.mxu0 %v644
    %665 = vmatprep.subr.mxu0 0.0
    %666 = vmatpush1.msra.mxu0 %v643
    %667 = vmatprep.subr.mxu0 0.0
    %668 = vmatpush1.msra.mxu0 %v642
    %669 = vmatprep.subr.mxu0 0.0
    %670 = vmatpush1.msra.mxu0 %v641
    %671 = vmatprep.subr.mxu0 0.0
    %672 = vmatpush1.msra.mxu0 %v640
    %673 = vmatprep.subr.mxu0 0.0
    %674 = vmatpush1.msra.mxu0 %v639
    %675 = vmatprep.subr.mxu0 0.0
    %676 = vmatpush1.msra.mxu0 %v638
    %677 = vmatprep.subr.mxu0 0.0
    %678 = vmatpush1.msra.mxu0 %v637
    %679 = vmatprep.subr.mxu0 0.0
    %680 = vmatpush1.msra.mxu0 %v636
    %681 = vmatprep.subr.mxu0 0.0
    %682 = vmatpush1.msra.mxu0 %v635
    %683 = vmatprep.subr.mxu0 0.0
    %684 = vmatpush2.msra.mxu0 0.0
    %685 = vmatprep.subr.mxu0 0.0
    %686 = vmatpush2.msra.mxu0 0.0
    %687 = vmatprep.subr.mxu0 0.0
    %688 = vmatpush2.msra.mxu0 0.0
    %689 = vmatprep.subr.mxu0 0.0
    %690 = vmatpush2.msra.mxu0 0.0
    %691 = vmatprep.subr.mxu0 0.0
    %692 = vmatpush2.msra.mxu0 0.0
    %693 = vmatprep.subr.mxu0 0.0
    %694 = vmatpush2.msra.mxu0 0.0
    %695 = vmatprep.subr.mxu0 0.0
    %696 = vmatpush2.msra.mxu0 0.0
    %697 = vmatprep.subr.mxu0 0.0
    %698 = vmatpush2.msra.mxu0 0.0
    %699 = vmatprep.subr.mxu0 0.0
    %700 = vmatpush2.msra.mxu0 0.0
    %701 = vmatprep.subr.mxu0 0.0
    %702 = vmatpush2.msra.mxu0 0.0
    %703 = vmatprep.subr.mxu0 0.0
    %704 = vmatpush2.msra.mxu0 0.0
    %705 = vmatprep.subr.mxu0 0.0
    %706 = vmatpush2.msra.mxu0 0.0
    %707 = vmatprep.subr.mxu0 0.0
    %708 = vmatpush2.msra.mxu0 0.0
    %709 = vmatprep.subr.mxu0 0.0
    %710 = vmatpush2.msra.mxu0 0.0
    %711 = vmatprep.subr.mxu0 0.0
    %712 = vmatpush2.msra.mxu0 0.0
    %713 = vmatprep.subr.mxu0 0.0
    %714 = vmatpush2.msra.mxu0 0.0
    %715 = vmatprep.mubr.f32.mxu0 0.0
    %716 = vmatmul.mubr.f32.gmra.mxu0 %v611
    %v717 = vpop.f32.mrf.mxu0
    %v718 = vadd.f32 0.0, %v717
    %v719 = vpop.f32.mrf.mxu0
    %720 = vmatprep.mubr.f32.mxu0 0.0
    %721 = vmatmul.mubr.f32.gmra.mxu0 %v616
    %v722 = vpop.f32.mrf.mxu0
    %v723 = vadd.f32 0.0, %v722
    %v724 = vpop.f32.mrf.mxu0
    %725 = vdwg.mxu0
    %726 = vmatprep.subr.mxu0 0.0
    %727 = vmatpush1.msra.mxu0 %v634
    %728 = vmatprep.subr.mxu0 0.0
    %729 = vmatpush1.msra.mxu0 %v633
    %730 = vmatprep.subr.mxu0 0.0
    %731 = vmatpush1.msra.mxu0 %v632
    %732 = vmatprep.subr.mxu0 0.0
    %733 = vmatpush1.msra.mxu0 %v631
    %734 = vmatprep.subr.mxu0 0.0
    %735 = vmatpush1.msra.mxu0 %v630
    %736 = vmatprep.subr.mxu0 0.0
    %737 = vmatpush1.msra.mxu0 %v629
    %738 = vmatprep.subr.mxu0 0.0
    %739 = vmatpush1.msra.mxu0 %v628
    %740 = vmatprep.subr.mxu0 0.0
    %741 = vmatpush1.msra.mxu0 %v627
    %742 = vmatprep.subr.mxu0 0.0
    %743 = vmatpush1.msra.mxu0 %v626
    %744 = vmatprep.subr.mxu0 0.0
    %745 = vmatpush1.msra.mxu0 %v625
    %746 = vmatprep.subr.mxu0 0.0
    %747 = vmatpush1.msra.mxu0 %v624
    %748 = vmatprep.subr.mxu0 0.0
    %749 = vmatpush1.msra.mxu0 %v623
    %750 = vmatprep.subr.mxu0 0.0
    %751 = vmatpush1.msra.mxu0 %v622
    %752 = vmatprep.subr.mxu0 0.0
    %753 = vmatpush1.msra.mxu0 %v621
    %754 = vmatprep.subr.mxu0 0.0
    %755 = vmatpush1.msra.mxu0 %v620
    %756 = vmatprep.subr.mxu0 0.0
    %757 = vmatpush1.msra.mxu0 %v619
    %758 = vmatprep.subr.mxu0 0.0
    %759 = vmatpush2.msra.mxu0 0.0
    %760 = vmatprep.subr.mxu0 0.0
    %761 = vmatpush2.msra.mxu0 0.0
    %762 = vmatprep.subr.mxu0 0.0
    %763 = vmatpush2.msra.mxu0 0.0
    %764 = vmatprep.subr.mxu0 0.0
    %765 = vmatpush2.msra.mxu0 0.0
    %766 = vmatprep.subr.mxu0 0.0
    %767 = vmatpush2.msra.mxu0 0.0
    %768 = vmatprep.subr.mxu0 0.0
    %769 = vmatpush2.msra.mxu0 0.0
    %770 = vmatprep.subr.mxu0 0.0
    %771 = vmatpush2.msra.mxu0 0.0
    %772 = vmatprep.subr.mxu0 0.0
    %773 = vmatpush2.msra.mxu0 0.0
    %774 = vmatprep.subr.mxu0 0.0
    %775 = vmatpush2.msra.mxu0 0.0
    %776 = vmatprep.subr.mxu0 0.0
    %777 = vmatpush2.msra.mxu0 0.0
    %778 = vmatprep.subr.mxu0 0.0
    %779 = vmatpush2.msra.mxu0 0.0
    %780 = vmatprep.subr.mxu0 0.0
    %781 = vmatpush2.msra.mxu0 0.0
    %782 = vmatprep.subr.mxu0 0.0
    %783 = vmatpush2.msra.mxu0 0.0
    %784 = vmatprep.subr.mxu0 0.0
    %785 = vmatpush2.msra.mxu0 0.0
    %786 = vmatprep.subr.mxu0 0.0
    %787 = vmatpush2.msra.mxu0 0.0
    %788 = vmatprep.subr.mxu0 0.0
    %789 = vmatpush2.msra.mxu0 0.0
    %790 = vmatprep.mubr.f32.mxu0 0.0
    %791 = vmatmul.mubr.f32.gmra.mxu0 %v314
    %v792 = vpop.f32.mrf.mxu0
    %v793 = vadd.f32 %v718, %v792
    %v794 = vpop.f32.mrf.mxu0
    %795 = vmatprep.mubr.f32.mxu0 0.0
    %796 = vmatmul.mubr.f32.gmra.mxu0 %v319
    %v797 = vpop.f32.mrf.mxu0
    %v798 = vadd.f32 %v723, %v797
    %v799 = vpop.f32.mrf.mxu0
    %800 = vdwg.mxu0
    %v801 = vld [vmem:[#allocation2 + $0x4ae] sm:$0x1]
    %v802 = vlaneseq
    %v803 = vshrl.u32 %v802, 7
    %v804 = vsub.s32 0, %v803
    %v805 = vrot.slane %v801, %v804
    %v806 = vadd.f32 %v793, %v805
    %v807 = vadd.f32 %v798, %v805
    %vm808 = vcmp.gt.f32.partialorder %v806, 0.0
    %vm809 = vcmp.gt.f32.partialorder %v807, 0.0
    %v810 = vmul.f32 %v806, 0.2
    %v811 = vmul.f32 %v807, 0.2
    %v812 = vsel %vm808, %v806, %v810
    %v813 = vsel %vm809, %v807, %v811
    %v814 = vsel %vm808, 1.0, 0.2
    %v815 = vsel %vm809, 1.0, 0.2
    %v816 = vld [vmem:[#allocation2 + $0x4b2] sm:$0x1]
    %v817 = vlaneseq
    %v818 = vshrl.u32 %v817, 7
    %v819 = vsub.s32 0, %v818
    %v820 = vrot.slane %v816, %v819
    %v821 = vmul.f32 %v814, %v820
    %v822 = vmul.f32 %v815, %v820
    %v823 = vld [vmem:[#allocation2 + $0x328] sm:$0xff]
    %v824 = vld [vmem:[#allocation2 + $0x330] sm:$0xff]
    %v825 = vld [vmem:[#allocation2 + $0x338] sm:$0xff]
    %v826 = vld [vmem:[#allocation2 + $0x340] sm:$0xff]
    %v827 = vld [vmem:[#allocation2 + $0x348] sm:$0xff]
    %v828 = vld [vmem:[#allocation2 + $0x350] sm:$0xff]
    %v829 = vld [vmem:[#allocation2 + $0x358] sm:$0xff]
    %v830 = vld [vmem:[#allocation2 + $0x360] sm:$0xff]
    %v831 = vld [vmem:[#allocation2 + $0x368] sm:$0xff]
    %v832 = vld [vmem:[#allocation2 + $0x370] sm:$0xff]
    %v833 = vld [vmem:[#allocation2 + $0x378] sm:$0xff]
    %v834 = vld [vmem:[#allocation2 + $0x380] sm:$0xff]
    %v835 = vld [vmem:[#allocation2 + $0x388] sm:$0xff]
    %v836 = vld [vmem:[#allocation2 + $0x390] sm:$0xff]
    %v837 = vld [vmem:[#allocation2 + $0x398] sm:$0xff]
    %v838 = vld [vmem:[#allocation2 + $0x3a0] sm:$0xff]
    %839 = vmatprep.subr.mxu0 0.0
    %840 = vmatpush1.msra.mxu0 %v838
    %841 = vmatprep.subr.mxu0 0.0
    %842 = vmatpush1.msra.mxu0 %v837
    %843 = vmatprep.subr.mxu0 0.0
    %844 = vmatpush1.msra.mxu0 %v836
    %845 = vmatprep.subr.mxu0 0.0
    %846 = vmatpush1.msra.mxu0 %v835
    %847 = vmatprep.subr.mxu0 0.0
    %848 = vmatpush1.msra.mxu0 %v834
    %849 = vmatprep.subr.mxu0 0.0
    %850 = vmatpush1.msra.mxu0 %v833
    %851 = vmatprep.subr.mxu0 0.0
    %852 = vmatpush1.msra.mxu0 %v832
    %853 = vmatprep.subr.mxu0 0.0
    %854 = vmatpush1.msra.mxu0 %v831
    %855 = vmatprep.subr.mxu0 0.0
    %856 = vmatpush1.msra.mxu0 %v830
    %857 = vmatprep.subr.mxu0 0.0
    %858 = vmatpush1.msra.mxu0 %v829
    %859 = vmatprep.subr.mxu0 0.0
    %860 = vmatpush1.msra.mxu0 %v828
    %861 = vmatprep.subr.mxu0 0.0
    %862 = vmatpush1.msra.mxu0 %v827
    %863 = vmatprep.subr.mxu0 0.0
    %864 = vmatpush1.msra.mxu0 %v826
    %865 = vmatprep.subr.mxu0 0.0
    %866 = vmatpush1.msra.mxu0 %v825
    %867 = vmatprep.subr.mxu0 0.0
    %868 = vmatpush1.msra.mxu0 %v824
    %869 = vmatprep.subr.mxu0 0.0
    %870 = vmatpush1.msra.mxu0 %v823
    %871 = vmatprep.subr.mxu0 0.0
    %872 = vmatpush2.msra.mxu0 0.0
    %873 = vmatprep.subr.mxu0 0.0
    %874 = vmatpush2.msra.mxu0 0.0
    %875 = vmatprep.subr.mxu0 0.0
    %876 = vmatpush2.msra.mxu0 0.0
    %877 = vmatprep.subr.mxu0 0.0
    %878 = vmatpush2.msra.mxu0 0.0
    %879 = vmatprep.subr.mxu0 0.0
    %880 = vmatpush2.msra.mxu0 0.0
    %881 = vmatprep.subr.mxu0 0.0
    %882 = vmatpush2.msra.mxu0 0.0
    %883 = vmatprep.subr.mxu0 0.0
    %884 = vmatpush2.msra.mxu0 0.0
    %885 = vmatprep.subr.mxu0 0.0
    %886 = vmatpush2.msra.mxu0 0.0
    %887 = vmatprep.subr.mxu0 0.0
    %888 = vmatpush2.msra.mxu0 0.0
    %889 = vmatprep.subr.mxu0 0.0
    %890 = vmatpush2.msra.mxu0 0.0
    %891 = vmatprep.subr.mxu0 0.0
    %892 = vmatpush2.msra.mxu0 0.0
    %893 = vmatprep.subr.mxu0 0.0
    %894 = vmatpush2.msra.mxu0 0.0
    %895 = vmatprep.subr.mxu0 0.0
    %896 = vmatpush2.msra.mxu0 0.0
    %897 = vmatprep.subr.mxu0 0.0
    %898 = vmatpush2.msra.mxu0 0.0
    %899 = vmatprep.subr.mxu0 0.0
    %900 = vmatpush2.msra.mxu0 0.0
    %901 = vmatprep.subr.mxu0 0.0
    %902 = vmatpush2.msra.mxu0 0.0
    %903 = vmatprep.mubr.f32.mxu0 0.0
    %904 = vmatmul.mubr.f32.gmra.mxu0 %v812
    %v905 = vpop.f32.mrf.mxu0
    %v906 = vadd.f32 0.0, %v905
    %v907 = vpop.f32.mrf.mxu0
    %908 = vmatprep.mubr.f32.mxu0 0.0
    %909 = vmatmul.mubr.f32.gmra.mxu0 %v813
    %v910 = vpop.f32.mrf.mxu0
    %v911 = vadd.f32 0.0, %v910
    %v912 = vpop.f32.mrf.mxu0
    %913 = vmatprep.mubr.f32.mxu0 0.0
    %914 = vmatmul.mubr.f32.gmra.mxu0 %v821
    %v915 = vpop.f32.mrf.mxu0
    %v916 = vadd.f32 0.0, %v915
    %v917 = vpop.f32.mrf.mxu0
    %918 = vmatprep.mubr.f32.mxu0 0.0
    %919 = vmatmul.mubr.f32.gmra.mxu0 %v822
    %v920 = vpop.f32.mrf.mxu0
    %v921 = vadd.f32 0.0, %v920
    %v922 = vpop.f32.mrf.mxu0
    %923 = vdwg.mxu0
    %v924 = vld [vmem:[#allocation2 + $0x4af] sm:$0x1]
    %v925 = vlaneseq
    %v926 = vshrl.u32 %v925, 7
    %v927 = vsub.s32 0, %v926
    %v928 = vrot.slane %v924, %v927
    %v929 = vadd.f32 %v906, %v928
    %v930 = vadd.f32 %v911, %v928
    %vm931 = vcmp.gt.f32.partialorder %v929, 0.0
    %vm932 = vcmp.gt.f32.partialorder %v930, 0.0
    %v933 = vmul.f32 %v929, 0.2
    %v934 = vmul.f32 %v930, 0.2
    %v935 = vsel %vm931, %v929, %v933
    %v936 = vsel %vm932, %v930, %v934
    %v937 = vsel %vm931, 1.0, 0.2
    %v938 = vsel %vm932, 1.0, 0.2
    %v939 = vmul.f32 %v937, %v916
    %v940 = vmul.f32 %v938, %v921
    %v941 = vld [vmem:[#allocation2 + $0x3a8] sm:$0xff]
    %v942 = vld [vmem:[#allocation2 + $0x3b0] sm:$0xff]
    %v943 = vld [vmem:[#allocation2 + $0x3b8] sm:$0xff]
    %v944 = vld [vmem:[#allocation2 + $0x3c0] sm:$0xff]
    %v945 = vld [vmem:[#allocation2 + $0x3c8] sm:$0xff]
    %v946 = vld [vmem:[#allocation2 + $0x3d0] sm:$0xff]
    %v947 = vld [vmem:[#allocation2 + $0x3d8] sm:$0xff]
    %v948 = vld [vmem:[#allocation2 + $0x3e0] sm:$0xff]
    %v949 = vld [vmem:[#allocation2 + $0x3e8] sm:$0xff]
    %v950 = vld [vmem:[#allocation2 + $0x3f0] sm:$0xff]
    %v951 = vld [vmem:[#allocation2 + $0x3f8] sm:$0xff]
    %v952 = vld [vmem:[#allocation2 + $0x400] sm:$0xff]
    %v953 = vld [vmem:[#allocation2 + $0x408] sm:$0xff]
    %v954 = vld [vmem:[#allocation2 + $0x410] sm:$0xff]
    %v955 = vld [vmem:[#allocation2 + $0x418] sm:$0xff]
    %v956 = vld [vmem:[#allocation2 + $0x420] sm:$0xff]
    %957 = vmatprep.subr.mxu0 0.0
    %958 = vmatpush1.msra.mxu0 %v956
    %959 = vmatprep.subr.mxu0 0.0
    %960 = vmatpush1.msra.mxu0 %v955
    %961 = vmatprep.subr.mxu0 0.0
    %962 = vmatpush1.msra.mxu0 %v954
    %963 = vmatprep.subr.mxu0 0.0
    %964 = vmatpush1.msra.mxu0 %v953
    %965 = vmatprep.subr.mxu0 0.0
    %966 = vmatpush1.msra.mxu0 %v952
    %967 = vmatprep.subr.mxu0 0.0
    %968 = vmatpush1.msra.mxu0 %v951
    %969 = vmatprep.subr.mxu0 0.0
    %970 = vmatpush1.msra.mxu0 %v950
    %971 = vmatprep.subr.mxu0 0.0
    %972 = vmatpush1.msra.mxu0 %v949
    %973 = vmatprep.subr.mxu0 0.0
    %974 = vmatpush1.msra.mxu0 %v948
    %975 = vmatprep.subr.mxu0 0.0
    %976 = vmatpush1.msra.mxu0 %v947
    %977 = vmatprep.subr.mxu0 0.0
    %978 = vmatpush1.msra.mxu0 %v946
    %979 = vmatprep.subr.mxu0 0.0
    %980 = vmatpush1.msra.mxu0 %v945
    %981 = vmatprep.subr.mxu0 0.0
    %982 = vmatpush1.msra.mxu0 %v944
    %983 = vmatprep.subr.mxu0 0.0
    %984 = vmatpush1.msra.mxu0 %v943
    %985 = vmatprep.subr.mxu0 0.0
    %986 = vmatpush1.msra.mxu0 %v942
    %987 = vmatprep.subr.mxu0 0.0
    %988 = vmatpush1.msra.mxu0 %v941
    %989 = vmatprep.subr.mxu0 0.0
    %990 = vmatpush2.msra.mxu0 0.0
    %991 = vmatprep.subr.mxu0 0.0
    %992 = vmatpush2.msra.mxu0 0.0
    %993 = vmatprep.subr.mxu0 0.0
    %994 = vmatpush2.msra.mxu0 0.0
    %995 = vmatprep.subr.mxu0 0.0
    %996 = vmatpush2.msra.mxu0 0.0
    %997 = vmatprep.subr.mxu0 0.0
    %998 = vmatpush2.msra.mxu0 0.0
    %999 = vmatprep.subr.mxu0 0.0
    %1000 = vmatpush2.msra.mxu0 0.0
    %1001 = vmatprep.subr.mxu0 0.0
    %1002 = vmatpush2.msra.mxu0 0.0
    %1003 = vmatprep.subr.mxu0 0.0
    %1004 = vmatpush2.msra.mxu0 0.0
    %1005 = vmatprep.subr.mxu0 0.0
    %1006 = vmatpush2.msra.mxu0 0.0
    %1007 = vmatprep.subr.mxu0 0.0
    %1008 = vmatpush2.msra.mxu0 0.0
    %1009 = vmatprep.subr.mxu0 0.0
    %1010 = vmatpush2.msra.mxu0 0.0
    %1011 = vmatprep.subr.mxu0 0.0
    %1012 = vmatpush2.msra.mxu0 0.0
    %1013 = vmatprep.subr.mxu0 0.0
    %1014 = vmatpush2.msra.mxu0 0.0
    %1015 = vmatprep.subr.mxu0 0.0
    %1016 = vmatpush2.msra.mxu0 0.0
    %1017 = vmatprep.subr.mxu0 0.0
    %1018 = vmatpush2.msra.mxu0 0.0
    %1019 = vmatprep.subr.mxu0 0.0
    %1020 = vmatpush2.msra.mxu0 0.0
    %1021 = vmatprep.mubr.f32.mxu0 0.0
    %1022 = vmatmul.mubr.f32.gmra.mxu0 %v935
    %v1023 = vpop.f32.mrf.mxu0
    %v1024 = vadd.f32 0.0, %v1023
    %v1025 = vpop.f32.mrf.mxu0
    %1026 = vmatprep.mubr.f32.mxu0 0.0
    %1027 = vmatmul.mubr.f32.gmra.mxu0 %v936
    %v1028 = vpop.f32.mrf.mxu0
    %v1029 = vadd.f32 0.0, %v1028
    %v1030 = vpop.f32.mrf.mxu0
    %1031 = vmatprep.mubr.f32.mxu0 0.0
    %1032 = vmatmul.mubr.f32.gmra.mxu0 %v939
    %v1033 = vpop.f32.mrf.mxu0
    %v1034 = vadd.f32 0.0, %v1033
    %v1035 = vpop.f32.mrf.mxu0
    %1036 = vmatprep.mubr.f32.mxu0 0.0
    %1037 = vmatmul.mubr.f32.gmra.mxu0 %v940
    %v1038 = vpop.f32.mrf.mxu0
    %v1039 = vadd.f32 0.0, %v1038
    %v1040 = vpop.f32.mrf.mxu0
    %1041 = vdwg.mxu0
    %v1042 = vld [vmem:[#allocation2 + $0x4b0] sm:$0x1]
    %v1043 = vlaneseq
    %v1044 = vshrl.u32 %v1043, 7
    %v1045 = vsub.s32 0, %v1044
    %v1046 = vrot.slane %v1042, %v1045
    %v1047 = vadd.f32 %v1024, %v1046
    %v1048 = vadd.f32 %v1029, %v1046
    %vm1049 = vcmp.gt.f32.partialorder %v1047, 0.0
    %vm1050 = vcmp.gt.f32.partialorder %v1048, 0.0
    %v1051 = vmul.f32 %v1047, 0.2
    %v1052 = vmul.f32 %v1048, 0.2
    %v1053 = vsel %vm1049, %v1047, %v1051
    %v1054 = vsel %vm1050, %v1048, %v1052
    %v1055 = vsel %vm1049, 1.0, 0.2
    %v1056 = vsel %vm1050, 1.0, 0.2
    %v1057 = vmul.f32 %v1055, %v1034
    %v1058 = vmul.f32 %v1056, %v1039
    %v1059 = vld [vmem:[#allocation2 + $0x428] sm:$0xff]
    %v1060 = vld [vmem:[#allocation2 + $0x430] sm:$0xff]
    %v1061 = vld [vmem:[#allocation2 + $0x438] sm:$0xff]
    %v1062 = vld [vmem:[#allocation2 + $0x440] sm:$0xff]
    %v1063 = vld [vmem:[#allocation2 + $0x448] sm:$0xff]
    %v1064 = vld [vmem:[#allocation2 + $0x450] sm:$0xff]
    %v1065 = vld [vmem:[#allocation2 + $0x458] sm:$0xff]
    %v1066 = vld [vmem:[#allocation2 + $0x460] sm:$0xff]
    %v1067 = vld [vmem:[#allocation2 + $0x468] sm:$0xff]
    %v1068 = vld [vmem:[#allocation2 + $0x470] sm:$0xff]
    %v1069 = vld [vmem:[#allocation2 + $0x478] sm:$0xff]
    %v1070 = vld [vmem:[#allocation2 + $0x480] sm:$0xff]
    %v1071 = vld [vmem:[#allocation2 + $0x488] sm:$0xff]
    %v1072 = vld [vmem:[#allocation2 + $0x490] sm:$0xff]
    %v1073 = vld [vmem:[#allocation2 + $0x498] sm:$0xff]
    %v1074 = vld [vmem:[#allocation2 + $0x4a0] sm:$0xff]
    %1075 = vmatprep.subr.mxu0 0.0
    %1076 = vmatpush1.msra.mxu0 %v1074
    %1077 = vmatprep.subr.mxu0 0.0
    %1078 = vmatpush1.msra.mxu0 %v1073
    %1079 = vmatprep.subr.mxu0 0.0
    %1080 = vmatpush1.msra.mxu0 %v1072
    %1081 = vmatprep.subr.mxu0 0.0
    %1082 = vmatpush1.msra.mxu0 %v1071
    %1083 = vmatprep.subr.mxu0 0.0
    %1084 = vmatpush1.msra.mxu0 %v1070
    %1085 = vmatprep.subr.mxu0 0.0
    %1086 = vmatpush1.msra.mxu0 %v1069
    %1087 = vmatprep.subr.mxu0 0.0
    %1088 = vmatpush1.msra.mxu0 %v1068
    %1089 = vmatprep.subr.mxu0 0.0
    %1090 = vmatpush1.msra.mxu0 %v1067
    %1091 = vmatprep.subr.mxu0 0.0
    %1092 = vmatpush1.msra.mxu0 %v1066
    %1093 = vmatprep.subr.mxu0 0.0
    %1094 = vmatpush1.msra.mxu0 %v1065
    %1095 = vmatprep.subr.mxu0 0.0
    %1096 = vmatpush1.msra.mxu0 %v1064
    %1097 = vmatprep.subr.mxu0 0.0
    %1098 = vmatpush1.msra.mxu0 %v1063
    %1099 = vmatprep.subr.mxu0 0.0
    %1100 = vmatpush1.msra.mxu0 %v1062
    %1101 = vmatprep.subr.mxu0 0.0
    %1102 = vmatpush1.msra.mxu0 %v1061
    %1103 = vmatprep.subr.mxu0 0.0
    %1104 = vmatpush1.msra.mxu0 %v1060
    %1105 = vmatprep.subr.mxu0 0.0
    %1106 = vmatpush1.msra.mxu0 %v1059
    %1107 = vmatprep.subr.mxu0 0.0
    %1108 = vmatpush2.msra.mxu0 0.0
    %1109 = vmatprep.subr.mxu0 0.0
    %1110 = vmatpush2.msra.mxu0 0.0
    %1111 = vmatprep.subr.mxu0 0.0
    %1112 = vmatpush2.msra.mxu0 0.0
    %1113 = vmatprep.subr.mxu0 0.0
    %1114 = vmatpush2.msra.mxu0 0.0
    %1115 = vmatprep.subr.mxu0 0.0
    %1116 = vmatpush2.msra.mxu0 0.0
    %1117 = vmatprep.subr.mxu0 0.0
    %1118 = vmatpush2.msra.mxu0 0.0
    %1119 = vmatprep.subr.mxu0 0.0
    %1120 = vmatpush2.msra.mxu0 0.0
    %1121 = vmatprep.subr.mxu0 0.0
    %1122 = vmatpush2.msra.mxu0 0.0
    %1123 = vmatprep.subr.mxu0 0.0
    %1124 = vmatpush2.msra.mxu0 0.0
    %1125 = vmatprep.subr.mxu0 0.0
    %1126 = vmatpush2.msra.mxu0 0.0
    %1127 = vmatprep.subr.mxu0 0.0
    %1128 = vmatpush2.msra.mxu0 0.0
    %1129 = vmatprep.subr.mxu0 0.0
    %1130 = vmatpush2.msra.mxu0 0.0
    %1131 = vmatprep.subr.mxu0 0.0
    %1132 = vmatpush2.msra.mxu0 0.0
    %1133 = vmatprep.subr.mxu0 0.0
    %1134 = vmatpush2.msra.mxu0 0.0
    %1135 = vmatprep.subr.mxu0 0.0
    %1136 = vmatpush2.msra.mxu0 0.0
    %1137 = vmatprep.subr.mxu0 0.0
    %1138 = vmatpush2.msra.mxu0 0.0
    %1139 = vmatprep.mubr.f32.mxu0 0.0
    %1140 = vmatmul.mubr.f32.gmra.mxu0 %v1053
    %v1141 = vpop.f32.mrf.mxu0
    %v1142 = vadd.f32 0.0, %v1141
    %v1143 = vpop.f32.mrf.mxu0
    %1144 = vmatprep.mubr.f32.mxu0 0.0
    %1145 = vmatmul.mubr.f32.gmra.mxu0 %v1054
    %v1146 = vpop.f32.mrf.mxu0
    %v1147 = vadd.f32 0.0, %v1146
    %v1148 = vpop.f32.mrf.mxu0
    %1149 = vmatprep.mubr.f32.mxu0 0.0
    %1150 = vmatmul.mubr.f32.gmra.mxu0 %v1057
    %v1151 = vpop.f32.mrf.mxu0
    %v1152 = vadd.f32 0.0, %v1151
    %v1153 = vpop.f32.mrf.mxu0
    %1154 = vmatprep.mubr.f32.mxu0 0.0
    %1155 = vmatmul.mubr.f32.gmra.mxu0 %v1058
    %v1156 = vpop.f32.mrf.mxu0
    %v1157 = vadd.f32 0.0, %v1156
    %v1158 = vpop.f32.mrf.mxu0
    %1159 = vdwg.mxu0
    %v1160 = vld [vmem:[#allocation2 + $0x4b1] sm:$0x1]
    %v1161 = vlaneseq
    %v1162 = vshrl.u32 %v1161, 7
    %v1163 = vsub.s32 0, %v1162
    %v1164 = vrot.slane %v1160, %v1163
    %v1165 = vadd.f32 %v1142, %v1164
    %v1166 = vadd.f32 %v1147, %v1164
    %v1167 = vlaneseq
    %v1168 = vand.u32 %v1167, 127
    %vm1169 = vcmp.lt.s32.totalorder %v1168, 4
    %v1170 = vand.u32 2147483647, %v1152
    %v1171 = vand.u32 2147483647, %v1157
    %v1172 = vsel %vm1169, %v1170, 1.0
    %v1173 = vsel %vm1169, %v1171, 1.0
    %v1174 = vlog2.pop %v1172
    %v1175 = vmul.f32 %v1174, 0.6931472
    %v1176 = vlog2.pop %v1173
    %v1177 = vmul.f32 %v1176, 0.6931472
    %vm1178 = vcmask 31744
    %1179 = vst.msk [vmem:[%s3] sm:$0xff] %vm1178, %v1165
    %1180 = vst.msk [vmem:[%s3 + $0x8] sm:$0xff] %vm1178, %v1166
    %1181 = vadd.xlane.f32.xlu0 %v1175
    %v1182 = vpop.xlane.xlu0 %1181
    %1183 = vadd.xlane.f32.xlu0 %v1177
    %v1184 = vpop.xlane.xlu0 %1183
    %vm1185 = vcmask 39968
    %1186 = vst.msk [vmem:[%s3] sm:$0xff] %vm1185, %v1182
    %1187 = vst.msk [vmem:[%s3 + $0x8] sm:$0xff] %vm1185, %v1184
    // Predicated region
    $region18: #{tpu_custom_call.1} parent=1 // pred_check
      _
    $region19: #{tpu_custom_call.1} parent=1 // pred_check_branch
      %1189 = sbr.rel (0) target = $region21
    $region20: #{tpu_custom_call.1} parent=1 // pred_region
      _
    $region21: #{tpu_custom_call.1} parent=1 // pred_fallthru
      _
    // Predicated region
    $region22: #{tpu_custom_call.1} parent=1 // pred_check
      _
    $region23: #{tpu_custom_call.1} parent=1 // pred_check_branch
      %1191 = sbr.rel (0) target = $region25
    $region24: #{tpu_custom_call.1} parent=1 // pred_region
      _
    $region25: #{tpu_custom_call.1} parent=1 // pred_fallthru
      _
    %1192 = vsyncpa [#allocation3], 1

</llo_original>
